<compile_context>
chip_gen: v7x
topology: tpu7x:2x2x1
jax: 0.10.0
libtpu: 0.0.40
codegen_flags: <defaults>
</compile_context>

<pallas_src>
import math
import functools

import jax
import jax.numpy as jnp
import numpy as np
from jax import lax
from jax.experimental import pallas as pl
from jax.experimental.pallas import tpu as pltpu


# ----------------------------------------------------------------- helpers
def _layernorm(x, w, b, eps=1e-5):
    # x: (T, C) f32, w/b: (1, C) f32; biased variance like torch.nn.LayerNorm
    mu = jnp.mean(x, axis=-1, keepdims=True)
    xc = x - mu
    var = jnp.mean(xc * xc, axis=-1, keepdims=True)
    return xc * lax.rsqrt(var + eps) * w + b


def _gelu_tanh(x):
    # NewGELU: 0.5*x*(1+tanh(sqrt(2/pi)*(x+0.044715*x^3)))
    c = math.sqrt(2.0 / math.pi)
    return 0.5 * x * (1.0 + jnp.tanh(c * (x + 0.044715 * x * x * x)))


def _pick_mlp_tile(hidden, cap=2048):
    # Largest multiple-of-128 divisor of `hidden` that is <= cap.
    if hidden <= cap:
        return hidden
    for cand in range(cap, 127, -128):
        if hidden % cand == 0:
            return cand
    return hidden


# ------------------------------------------------------------------ kernel 1
def qkv_kernel(n_head, x_ref, ln1_w_ref, ln1_b_ref, w_attn_ref, b_attn_ref,
               q_ref, kT_ref, vT_ref):
    """LN1 + fused QKV projection; K/V emitted head-major-transposed."""
    tq, C = x_ref.shape
    D = C // n_head
    h = _layernorm(x_ref[...].astype(jnp.float32),
                   ln1_w_ref[...], ln1_b_ref[...])
    qkv = jnp.dot(h.astype(jnp.bfloat16), w_attn_ref[...],
                  preferred_element_type=jnp.float32) + b_attn_ref[...]
    # Q keeps the lane-dense (tq, C) layout (1/sqrt(D) already folded into W).
    q_ref[...] = qkv[:, :C].astype(q_ref.dtype)
    # (tq, C) -> (C, tq) 2-D transpose (XLU) then a free leading-dim split to
    # (H, D, tq).  Last dim tq is lane-dense (multiple of 128).  This is done
    # once per element here instead of once per q-tile inside kernel 2.
    kT_ref[...] = qkv[:, C:2 * C].T.reshape(n_head, D, tq).astype(kT_ref.dtype)
    vT_ref[...] = qkv[:, 2 * C:].T.reshape(n_head, D, tq).astype(vT_ref.dtype)


# ------------------------------------------------------------------ kernel 2
def attn_mlp_kernel(n_head, tq, tk, mlp_tile,
                    x_ref, q_ref, kT_ref, vT_ref,
                    w_proja_ref, b_proja_ref,
                    ln2_w_ref, ln2_b_ref,
                    w_fc_ref, b_fc_ref,
                    w_projm_ref, b_projm_ref,
                    out_ref):
    """Causal flash attention + proj + residual + LN2 + tiled MLP + residual."""
    x = x_ref[...].astype(jnp.float32)                 # (tq, C) residual stream
    H = n_head
    _, C = x_ref.shape
    D = C // H

    q_idx = pl.program_id(1)
    q0 = q_idx * tq

    # Small per-tile relayout of Q only (tq*C elements), bf16.
    qh = q_ref[...].reshape(tq, H, D).swapaxes(0, 1)   # (H, tq, D)

    row = q0 + lax.broadcasted_iota(jnp.int32, (tq, tk), 0)
    col_local = lax.broadcasted_iota(jnp.int32, (tq, tk), 1)

    def kv_step(kv, carry):
        m_i, l_i, acc = carry
        start = pl.multiple_of(kv * tk, tk)
        kT = kT_ref[:, :, pl.ds(start, tk)]            # (H, D, tk) bf16
        vT = vT_ref[:, :, pl.ds(start, tk)]            # (H, D, tk) bf16
        s = jnp.einsum('hqd,hdk->hqk', qh, kT,
                       preferred_element_type=jnp.float32)   # (H, tq, tk) f32
        keep = row >= (start + col_local)
        s = jnp.where(keep[None, :, :], s, jnp.float32(-1e30))
        m_new = jnp.maximum(m_i, jnp.max(s, axis=-1, keepdims=True))
        a = jnp.exp(m_i - m_new)
        p = jnp.exp(s - m_new)
        l_new = a * l_i + jnp.sum(p, axis=-1, keepdims=True)
        acc_new = a * acc + jnp.einsum('hqk,hdk->hqd', p.astype(jnp.bfloat16),
                                       vT, preferred_element_type=jnp.float32)
        return m_new, l_new, acc_new

    # Causal skip: only kv tiles up to (and including) this q tile's diagonal.
    n_kv = (q_idx + 1) * (tq // tk)
    m0 = jnp.full((H, tq, 1), -1e30, jnp.float32)
    l0 = jnp.zeros((H, tq, 1), jnp.float32)
    acc0 = jnp.zeros((H, tq, D), jnp.float32)
    _, l_i, acc = lax.fori_loop(0, n_kv, kv_step, (m0, l0, acc0))

    y = acc * pl.reciprocal(l_i, approx=False)         # exact normalization
    y = y.swapaxes(0, 1).reshape(tq, C)                # back to (tq, C)

    y = jnp.dot(y.astype(jnp.bfloat16), w_proja_ref[...],
                preferred_element_type=jnp.float32) + b_proja_ref[...]
    x = x + y

    # LN2 + MLP, hidden (4C) dimension tiled to bound the live activation.
    h2 = _layernorm(x, ln2_w_ref[...], ln2_b_ref[...]).astype(jnp.bfloat16)
    hidden = w_fc_ref.shape[1]
    acc_mlp = jnp.zeros((tq, C), jnp.float32)
    for t in range(hidden // mlp_tile):
        lo, hi = t * mlp_tile, (t + 1) * mlp_tile
        f = jnp.dot(h2, w_fc_ref[:, lo:hi],
                    preferred_element_type=jnp.float32) + b_fc_ref[:, lo:hi]
        f = _gelu_tanh(f)
        acc_mlp = acc_mlp + jnp.dot(f.astype(jnp.bfloat16),
                                    w_projm_ref[lo:hi, :],
                                    preferred_element_type=jnp.float32)
    out_ref[...] = (x + acc_mlp + b_projm_ref[...]).astype(out_ref.dtype)


# ------------------------------------------------------------------ wrapper
def block_forward(x, params, n_head, *, tq=None, tk=None, mlp_tile=None):
    B, T, C = x.shape
    assert C % n_head == 0
    D = C // n_head
    (ln1_w, ln1_b, w_attn, b_attn, w_proja, b_proja,
     ln2_w, ln2_b, w_fc, b_fc, w_projm, b_projm) = params

    if tq is None:
        tq = min(T, 256)        # 256 fills v6e/v7x MXU rows; multiple of v5e's 128
    assert T % tq == 0 and tq % 8 == 0
    n_qt = T // tq
    if tk is None:
        tk = min(tq, 256)
    assert tq % tk == 0 and T % tk == 0 and tk % 128 == 0
    if mlp_tile is None:
        mlp_tile = _pick_mlp_tile(4 * C)
    assert (4 * C) % mlp_tile == 0

    # Fold the 1/sqrt(D) attention scale into the Q columns of the projection.
    scale = 1.0 / math.sqrt(D)
    col_scale = jnp.concatenate(
        [jnp.full((1, C), scale, jnp.float32), jnp.ones((1, 2 * C), jnp.float32)],
        axis=-1)
    w_attn_s = (w_attn * col_scale).astype(jnp.bfloat16)
    b_attn_s = b_attn * col_scale                       # stays f32 (bias add)

    w_proja_bf = w_proja.astype(jnp.bfloat16)
    w_fc_bf = w_fc.astype(jnp.bfloat16)
    w_projm_bf = w_projm.astype(jnp.bfloat16)

    # Whole-array VMEM residency for weights/biases: single copy, no per-step
    # double-buffered DMA.
    vmem_ws = pl.BlockSpec(memory_space=pltpu.MemorySpace.VMEM)

    cparams = pltpu.CompilerParams(
        dimension_semantics=("parallel", "parallel"),
        vmem_limit_bytes=48 * 1024 * 1024)   # leaves headroom on v7x's 64 MiB

    # ---- kernel 1: LN1 + QKV projection (K/V emitted head-major) -----------
    q_bt, kT, vT = pl.pallas_call(
        functools.partial(qkv_kernel, n_head),
        out_shape=(jax.ShapeDtypeStruct((B, T, C), jnp.bfloat16),
                   jax.ShapeDtypeStruct((B, n_head, D, T), jnp.bfloat16),
                   jax.ShapeDtypeStruct((B, n_head, D, T), jnp.bfloat16)),
        grid=(B, n_qt),
        in_specs=[
            pl.BlockSpec((None, tq, C), lambda b, qi: (b, qi, 0)),   # x tile
            vmem_ws, vmem_ws,                                        # ln1 w/b
            vmem_ws, vmem_ws,                                        # W_qkv, b_qkv
        ],
        out_specs=(
            pl.BlockSpec((None, tq, C), lambda b, qi: (b, qi, 0)),
            pl.BlockSpec((None, n_head, D, tq), lambda b, qi: (b, 0, 0, qi)),
            pl.BlockSpec((None, n_head, D, tq), lambda b, qi: (b, 0, 0, qi)),
        ),
        compiler_params=cparams,
        cost_estimate=pl.CostEstimate(
            flops=2 * B * T * C * 3 * C,
            transcendentals=0,
            bytes_accessed=4 * B * T * C + 2 * C * 3 * C + 2 * B * T * 3 * C),
    )(x, ln1_w, ln1_b, w_attn_s, b_attn_s)

    # ---- kernel 2: flash attention + residual + LN2 + MLP + residual -------
    flops = (2 * B * n_head * T * T * D        # causal QK^T + P@V (~half of full)
             + 2 * B * T * C * C               # attention output projection
             + 16 * B * T * C * C)             # MLP fc + proj
    transc = B * n_head * T * T // 2 + B * T * 4 * C
    bytes_acc = (4 * B * T * C                 # x in (f32)
                 + 4 * B * T * C               # out
                 + 2 * B * T * C               # Q (bf16)
                 + 2 * 2 * B * T * C           # K^T + V^T: fetched once per batch
                 + 2 * 9 * C * C)              # bf16 weights

    out = pl.pallas_call(
        functools.partial(attn_mlp_kernel, n_head, tq, tk, mlp_tile),
        out_shape=jax.ShapeDtypeStruct((B, T, C), x.dtype),
        grid=(B, n_qt),
        in_specs=[
            pl.BlockSpec((None, tq, C), lambda b, qi: (b, qi, 0)),   # x residual
            pl.BlockSpec((None, tq, C), lambda b, qi: (b, qi, 0)),   # Q tile
            # K^T / V^T: whole (H, D, T) per batch; block index constant across
            # the q axis, so they are DMA'd once per batch and the kv loop
            # slices them in VMEM.
            pl.BlockSpec((None, n_head, D, T), lambda b, qi: (b, 0, 0, 0)),
            pl.BlockSpec((None, n_head, D, T), lambda b, qi: (b, 0, 0, 0)),
            vmem_ws, vmem_ws,                                        # attn proj W/b
            vmem_ws, vmem_ws,                                        # ln2 w/b
            vmem_ws, vmem_ws,                                        # fc W/b
            vmem_ws, vmem_ws,                                        # mlp proj W/b
        ],
        out_specs=pl.BlockSpec((None, tq, C), lambda b, qi: (b, qi, 0)),
        compiler_params=cparams,
        cost_estimate=pl.CostEstimate(flops=flops, transcendentals=transc,
                                      bytes_accessed=bytes_acc),
    )(x, q_bt, kT, vT,
      w_proja_bf, b_proja, ln2_w, ln2_b, w_fc_bf, b_fc, w_projm_bf, b_projm)
    return out


# ------------------------------------------------------------------ reference
def reference_forward(x, params, n_head):
    (ln1_w, ln1_b, w_attn, b_attn, w_proja, b_proja,
     ln2_w, ln2_b, w_fc, b_fc, w_projm, b_projm) = params
    B, T, C = x.shape
    D = C // n_head

    def ln(v, w, b):
        mu = jnp.mean(v, axis=-1, keepdims=True)
        var = jnp.mean((v - mu) ** 2, axis=-1, keepdims=True)
        return (v - mu) / jnp.sqrt(var + 1e-5) * w + b

    h1 = ln(x, ln1_w, ln1_b)
    qkv = h1 @ w_attn + b_attn
    q, k, v = jnp.split(qkv, 3, axis=-1)
    q = q.reshape(B, T, n_head, D).transpose(0, 2, 1, 3)
    k = k.reshape(B, T, n_head, D).transpose(0, 2, 1, 3)
    v = v.reshape(B, T, n_head, D).transpose(0, 2, 1, 3)
    att = jnp.einsum('bhtd,bhsd->bhts', q, k) / math.sqrt(D)
    mask = jnp.tril(jnp.ones((T, T), dtype=bool))
    att = jnp.where(mask, att, -jnp.inf)
    att = jax.nn.softmax(att, axis=-1)
    y = jnp.einsum('bhts,bhsd->bhtd', att, v)
    y = y.transpose(0, 2, 1, 3).reshape(B, T, C)
    x = x + (y @ w_proja + b_proja)
    h2 = ln(x, ln2_w, ln2_b)
    f = h2 @ w_fc + b_fc
    c = math.sqrt(2.0 / math.pi)
    f = 0.5 * f * (1.0 + jnp.tanh(c * (f + 0.044715 * f ** 3)))
    return x + (f @ w_projm + b_projm)


if __name__ == "__main__":
    # Lane-dense toy config: C, 3C, 4C and T multiples of 128; tq=128 gives a
    # (B, n_qt) = (4, 2) grid (8 steps -> pipeline + megacore slack) and
    # exercises the causal kv-tile skip.
    B, T, C, n_head = 4, 256, 128, 4
    tq = 128

    key = jax.random.PRNGKey(0)
    keys = jax.random.split(key, 8)

    ln1_w = jnp.ones((1, C), jnp.float32)
    ln1_b = jnp.zeros((1, C), jnp.float32)
    ln2_w = jnp.ones((1, C), jnp.float32)
    ln2_b = jnp.zeros((1, C), jnp.float32)
    w_attn = 0.02 * jax.random.normal(keys[0], (C, 3 * C), jnp.float32)
    b_attn = 0.02 * jax.random.normal(keys[1], (1, 3 * C), jnp.float32)
    w_proja = 0.02 * jax.random.normal(keys[2], (C, C), jnp.float32)
    b_proja = 0.02 * jax.random.normal(keys[3], (1, C), jnp.float32)
    w_fc = 0.02 * jax.random.normal(keys[4], (C, 4 * C), jnp.float32)
    b_fc = 0.02 * jax.random.normal(keys[5], (1, 4 * C), jnp.float32)
    w_projm = 0.02 * jax.random.normal(keys[6], (4 * C, C), jnp.float32)
    b_projm = 0.02 * jax.random.normal(keys[7], (1, C), jnp.float32)

    params = (ln1_w, ln1_b, w_attn, b_attn, w_proja, b_proja,
              ln2_w, ln2_b, w_fc, b_fc, w_projm, b_projm)

    x = jax.random.normal(jax.random.PRNGKey(42), (B, T, C), jnp.float32)

    out = jax.block_until_ready(block_forward(x, params, n_head, tq=tq))
    ref = jax.block_until_ready(reference_forward(x, params, n_head))

    # bf16 MXU operands (f32 accumulation) vs pure-f32 reference -> loose tol.
    np.testing.assert_allclose(np.asarray(out), np.asarray(ref),
                               rtol=2e-2, atol=2e-2)
    print("KERNEL_OK")
</pallas_src>

<mosaic_0001>
module attributes {stable_mosaic.version = 11 : i64} {
  func.func @qkv_kernel(%arg0: i32, %arg1: i32, %arg2: memref<1x128x128xf32, #tpu.memory_space<vmem>>, %arg3: memref<1x128xf32, #tpu.memory_space<vmem>>, %arg4: memref<1x128xf32, #tpu.memory_space<vmem>>, %arg5: memref<128x384xbf16, #tpu.memory_space<vmem>>, %arg6: memref<1x384xf32, #tpu.memory_space<vmem>>, %arg7: memref<1x128x128xbf16, #tpu.memory_space<vmem>>, %arg8: memref<1x4x32x128xbf16, #tpu.memory_space<vmem>>, %arg9: memref<1x4x32x128xbf16, #tpu.memory_space<vmem>>) attributes {dimension_semantics = [#tpu.dimension_semantics<parallel>, #tpu.dimension_semantics<parallel>], iteration_bounds = array<i64: 4, 2>, scalar_prefetch = 0 : i64, scratch_operands = 0 : i64, tpu.core_type = #tpu.core_type<tc>, window_params = [{transform_indices = @transform_0, window_bounds = array<i64: 1, 128, 128>}, {pipeline_mode = #tpu.pipeline_mode<synchronous>, transform_indices = @transform_1, window_bounds = array<i64: 1, 128>}, {pipeline_mode = #tpu.pipeline_mode<synchronous>, transform_indices = @transform_2, window_bounds = array<i64: 1, 128>}, {pipeline_mode = #tpu.pipeline_mode<synchronous>, transform_indices = @transform_3, window_bounds = array<i64: 128, 384>}, {pipeline_mode = #tpu.pipeline_mode<synchronous>, transform_indices = @transform_4, window_bounds = array<i64: 1, 384>}, {transform_indices = @transform_5, window_bounds = array<i64: 1, 128, 128>}, {transform_indices = @transform_6, window_bounds = array<i64: 1, 4, 32, 128>}, {transform_indices = @transform_7, window_bounds = array<i64: 1, 4, 32, 128>}]} {
    %c0 = arith.constant 0 : index
    %c0_0 = arith.constant 0 : index
    %c0_1 = arith.constant 0 : index
    %0 = vector.load %arg2[%c0, %c0_0, %c0_1] : memref<1x128x128xf32, #tpu.memory_space<vmem>>, vector<1x128x128xf32>
    %1 = vector.shape_cast %0 : vector<1x128x128xf32> to vector<128x128xf32>
    %c0_2 = arith.constant 0 : index
    %c0_3 = arith.constant 0 : index
    %2 = vector.load %arg3[%c0_2, %c0_3] : memref<1x128xf32, #tpu.memory_space<vmem>>, vector<1x128xf32>
    %c0_4 = arith.constant 0 : index
    %c0_5 = arith.constant 0 : index
    %3 = vector.load %arg4[%c0_4, %c0_5] : memref<1x128xf32, #tpu.memory_space<vmem>>, vector<1x128xf32>
    %cst = arith.constant dense<0.000000e+00> : vector<128xf32>
    %4 = vector.multi_reduction <add>, %1, %cst [1] : vector<128x128xf32> to vector<128xf32>
    %5 = vector.shape_cast %4 : vector<128xf32> to vector<128x1xf32>
    %cst_6 = arith.constant 1.280000e+02 : f32
    %6 = vector.broadcast %cst_6 : f32 to vector<128x1xf32>
    %7 = arith.divf %5, %6 : vector<128x1xf32>
    %8 = vector.broadcast %7 : vector<128x1xf32> to vector<128x128xf32>
    %9 = arith.subf %1, %8 : vector<128x128xf32>
    %10 = arith.mulf %9, %9 : vector<128x128xf32>
    %cst_7 = arith.constant dense<0.000000e+00> : vector<128xf32>
    %11 = vector.multi_reduction <add>, %10, %cst_7 [1] : vector<128x128xf32> to vector<128xf32>
    %12 = vector.shape_cast %11 : vector<128xf32> to vector<128x1xf32>
    %cst_8 = arith.constant 1.280000e+02 : f32
    %13 = vector.broadcast %cst_8 : f32 to vector<128x1xf32>
    %14 = arith.divf %12, %13 : vector<128x1xf32>
    %cst_9 = arith.constant 9.99999974E-6 : f32
    %15 = vector.broadcast %cst_9 : f32 to vector<128x1xf32>
    %16 = arith.addf %14, %15 : vector<128x1xf32>
    %17 = math.rsqrt %16 : vector<128x1xf32>
    %18 = vector.broadcast %17 : vector<128x1xf32> to vector<128x128xf32>
    %19 = arith.mulf %9, %18 : vector<128x128xf32>
    %20 = vector.broadcast %2 : vector<1x128xf32> to vector<128x128xf32>
    %21 = arith.mulf %19, %20 : vector<128x128xf32>
    %22 = vector.broadcast %3 : vector<1x128xf32> to vector<128x128xf32>
    %23 = arith.addf %21, %22 : vector<128x128xf32>
    %24 = arith.truncf %23 : vector<128x128xf32> to vector<128x128xbf16>
    %c0_10 = arith.constant 0 : index
    %c0_11 = arith.constant 0 : index
    %25 = vector.load %arg5[%c0_10, %c0_11] : memref<128x384xbf16, #tpu.memory_space<vmem>>, vector<128x384xbf16>
    %cst_12 = arith.constant dense<0.000000e+00> : vector<128x384xf32>
    %26 = tpu.matmul %24, %25, %cst_12 {dimension_numbers = #tpu.dot_dimension_numbers<[1], [0], [0], [1], [0, 0, 1, 1], [], []>} : vector<128x128xbf16>, vector<128x384xbf16>, vector<128x384xf32> -> vector<128x384xf32>
    %c0_13 = arith.constant 0 : index
    %c0_14 = arith.constant 0 : index
    %27 = vector.load %arg6[%c0_13, %c0_14] : memref<1x384xf32, #tpu.memory_space<vmem>>, vector<1x384xf32>
    %28 = vector.broadcast %27 : vector<1x384xf32> to vector<128x384xf32>
    %29 = arith.addf %26, %28 : vector<128x384xf32>
    %30 = vector.extract_strided_slice %29 {offsets = [0, 0], sizes = [128, 128], strides = [1, 1]} : vector<128x384xf32> to vector<128x128xf32>
    %31 = arith.truncf %30 : vector<128x128xf32> to vector<128x128xbf16>
    %c0_15 = arith.constant 0 : index
    %c0_16 = arith.constant 0 : index
    %c0_17 = arith.constant 0 : index
    %32 = vector.load %arg7[%c0_15, %c0_16, %c0_17] : memref<1x128x128xbf16, #tpu.memory_space<vmem>>, vector<1x128x128xbf16>
    %33 = vector.shape_cast %32 : vector<1x128x128xbf16> to vector<128x128xbf16>
    %34 = vector.shape_cast %31 : vector<128x128xbf16> to vector<1x128x128xbf16>
    tpu.vector_store %arg7[%c0_15, %c0_16, %c0_17], %34 {strides = array<i32>} : memref<1x128x128xbf16, #tpu.memory_space<vmem>>, vector<1x128x128xbf16>,
    %35 = vector.extract_strided_slice %29 {offsets = [0, 128], sizes = [128, 128], strides = [1, 1]} : vector<128x384xf32> to vector<128x128xf32>
    %36 = tpu.transpose %35, [1, 0] : vector<128x128xf32> -> vector<128x128xf32>
    %37 = vector.shape_cast %36 : vector<128x128xf32> to vector<4x32x128xf32>
    %38 = arith.truncf %37 : vector<4x32x128xf32> to vector<4x32x128xbf16>
    %c0_18 = arith.constant 0 : index
    %c0_19 = arith.constant 0 : index
    %c0_20 = arith.constant 0 : index
    %c0_21 = arith.constant 0 : index
    %39 = vector.load %arg8[%c0_18, %c0_19, %c0_20, %c0_21] : memref<1x4x32x128xbf16, #tpu.memory_space<vmem>>, vector<1x4x32x128xbf16>
    %40 = vector.shape_cast %39 : vector<1x4x32x128xbf16> to vector<4x32x128xbf16>
    %41 = vector.shape_cast %38 : vector<4x32x128xbf16> to vector<1x4x32x128xbf16>
    tpu.vector_store %arg8[%c0_18, %c0_19, %c0_20, %c0_21], %41 {strides = array<i32>} : memref<1x4x32x128xbf16, #tpu.memory_space<vmem>>, vector<1x4x32x128xbf16>,
    %42 = vector.extract_strided_slice %29 {offsets = [0, 256], sizes = [128, 128], strides = [1, 1]} : vector<128x384xf32> to vector<128x128xf32>
    %43 = tpu.transpose %42, [1, 0] : vector<128x128xf32> -> vector<128x128xf32>
    %44 = vector.shape_cast %43 : vector<128x128xf32> to vector<4x32x128xf32>
    %45 = arith.truncf %44 : vector<4x32x128xf32> to vector<4x32x128xbf16>
    %c0_22 = arith.constant 0 : index
    %c0_23 = arith.constant 0 : index
    %c0_24 = arith.constant 0 : index
    %c0_25 = arith.constant 0 : index
    %46 = vector.load %arg9[%c0_22, %c0_23, %c0_24, %c0_25] : memref<1x4x32x128xbf16, #tpu.memory_space<vmem>>, vector<1x4x32x128xbf16>
    %47 = vector.shape_cast %46 : vector<1x4x32x128xbf16> to vector<4x32x128xbf16>
    %48 = vector.shape_cast %45 : vector<4x32x128xbf16> to vector<1x4x32x128xbf16>
    tpu.vector_store %arg9[%c0_22, %c0_23, %c0_24, %c0_25], %48 {strides = array<i32>} : memref<1x4x32x128xbf16, #tpu.memory_space<vmem>>, vector<1x4x32x128xbf16>,
    return
  }
  func.func @transform_0(%arg0: i32, %arg1: i32) -> (i32, i32, i32) {
    %c0_i32 = arith.constant 0 : i32
    %c0_i32_0 = arith.constant 0 : i32
    return %arg0, %arg1, %c0_i32 : i32, i32, i32
  }
  func.func @transform_1(%arg0: i32, %arg1: i32) -> (i32, i32) {
    %c0_i32 = arith.constant 0 : i32
    %c0_i32_0 = arith.constant 0 : i32
    %c0_i32_1 = arith.constant 0 : i32
    return %c0_i32, %c0_i32_0 : i32, i32
  }
  func.func @transform_2(%arg0: i32, %arg1: i32) -> (i32, i32) {
    %c0_i32 = arith.constant 0 : i32
    %c0_i32_0 = arith.constant 0 : i32
    %c0_i32_1 = arith.constant 0 : i32
    return %c0_i32, %c0_i32_0 : i32, i32
  }
  func.func @transform_3(%arg0: i32, %arg1: i32) -> (i32, i32) {
    %c0_i32 = arith.constant 0 : i32
    %c0_i32_0 = arith.constant 0 : i32
    %c0_i32_1 = arith.constant 0 : i32
    return %c0_i32, %c0_i32_0 : i32, i32
  }
  func.func @transform_4(%arg0: i32, %arg1: i32) -> (i32, i32) {
    %c0_i32 = arith.constant 0 : i32
    %c0_i32_0 = arith.constant 0 : i32
    %c0_i32_1 = arith.constant 0 : i32
    return %c0_i32, %c0_i32_0 : i32, i32
  }
  func.func @transform_5(%arg0: i32, %arg1: i32) -> (i32, i32, i32) {
    %c0_i32 = arith.constant 0 : i32
    %c0_i32_0 = arith.constant 0 : i32
    return %arg0, %arg1, %c0_i32 : i32, i32, i32
  }
  func.func @transform_6(%arg0: i32, %arg1: i32) -> (i32, i32, i32, i32) {
    %c0_i32 = arith.constant 0 : i32
    %c0_i32_0 = arith.constant 0 : i32
    %c0_i32_1 = arith.constant 0 : i32
    return %arg0, %c0_i32, %c0_i32_0, %arg1 : i32, i32, i32, i32
  }
  func.func @transform_7(%arg0: i32, %arg1: i32) -> (i32, i32, i32, i32) {
    %c0_i32 = arith.constant 0 : i32
    %c0_i32_0 = arith.constant 0 : i32
    %c0_i32_1 = arith.constant 0 : i32
    return %arg0, %c0_i32, %c0_i32_0, %arg1 : i32, i32, i32, i32
  }
}

</mosaic_0001>

<llo_original>
// kernel: tpu_custom_call.1
$region0: #{tpu_custom_call.1}
  #allocation0 [shape = 'u32[]', space=smem, size = 0x4, offset = 0x4, fixed_abs, tag = 'smem constant byte address 0x4 - core index']
  #allocation1 [shape = 'u32[144,128]{1,0:T(1,128)}', space=vmem, size = 0x12000, scoped, tag = 'internal scratch']
  %s0 = inlined_call_operand.hbm [shape: f32[4,256,128], index: 0, kind: input, shape index: {}]
  %s1 = inlined_call_operand.vmem [shape: f32[1,128], index: 1, kind: input, shape index: {}]
  %s2 = inlined_call_operand.vmem [shape: f32[1,128], index: 2, kind: input, shape index: {}]
  %s3 = inlined_call_operand.hbm [shape: bf16[128,384], index: 3, kind: input, shape index: {}]
  %s4 = inlined_call_operand.vmem [shape: f32[1,384], index: 4, kind: input, shape index: {}]
  %s5 = inlined_call_operand.hbm [shape: bf16[4,256,128], index: 5, kind: output, shape index: {0}]
  %s6 = inlined_call_operand.hbm [shape: bf16[4,4,32,256], index: 6, kind: output, shape index: {1}]
  %s7 = inlined_call_operand.hbm [shape: bf16[4,4,32,256], index: 7, kind: output, shape index: {2}]
  %8 = xla_tuple %s5, %s6, %s7
  %s9 = sld [smem:[#allocation0]]
  $region77: #{tpu_custom_call.1} parent=0
    _
  %s11 = ssub.s32 1, %s9
  %s12 = scalar_select 0, %s11, %s9
  $region1: #{tpu_custom_call.1} parent=0
    #allocation2 [shape = 'u8[131072]{0}', space=vmem, size = 0x20000, scoped, tag = 'input window, operand 0']
    #allocation3 [shape = 's32[2]{0}', space=sflag, size = 0x8, scoped, tag = 'scoped memory for tpu_custom_call.1']
    #allocation4 [shape = 's32[2]{0}', space=sflag, size = 0x8, scoped, tag = 'scoped memory for tpu_custom_call.1']
    #allocation5 [shape = 'u8[98304]{0}', space=vmem, size = 0x18000, scoped, tag = 'input window, operand 3, single buffered']
    #allocation6 [shape = 's32[1]{0}', space=sflag, size = 0x4, scoped, tag = 'scoped memory for tpu_custom_call.1']
    #allocation7 [shape = 'u8[65536]{0}', space=vmem, size = 0x10000, scoped, tag = 'output window, operand 0']
    #allocation8 [shape = 'u8[65536]{0}', space=vmem, size = 0x10000, scoped, tag = 'output window, operand 1']
    #allocation9 [shape = 's32[2]{0}', space=sflag, size = 0x8, scoped, tag = 'scoped memory for tpu_custom_call.1']
    #allocation10 [shape = 'u8[65536]{0}', space=vmem, size = 0x10000, scoped, tag = 'output window, operand 2']
    %13 = vsyncpa [#allocation3], 0
    %s14 = scalar_lea.sflag [#allocation3], 1
    %15 = vsyncpa %s14, 0
    %16 = vsyncpa [#allocation6], 0
    %17 = vsyncpa [#allocation4], 0
    %s18 = scalar_lea.sflag [#allocation4], 1
    %19 = vsyncpa %s18, 0
    %20 = vsyncpa [#allocation9], 0
    %s21 = scalar_lea.sflag [#allocation9], 1
    %22 = vsyncpa %s21, 0
    loop: start=0, step=1, limit=10
    $region2: #{tpu_custom_call.1} parent=1 // loop_pre_header
      _
    $region3: #{tpu_custom_call.1} parent=1 // loop_header
      %s24 = sphi 0, %s28
      %p25 = scmp.ge.s32.totalorder %s24, 10
      %s31 = sphi 0, %s43
      %s32 = sphi 0, %s39
      %s33 = sphi 0, %s31
      %s34 = sphi 0, %s32
      %s35 = sphi 0, %s33
      %s36 = sphi 0, %s34
      %s48 = sphi 0, %s50
      %s51 = sphi 0, %s48
      %s52 = sphi 0, %s51
      %s68 = sphi 0, %s52
      %s72 = sphi 0, %s72
      %s74 = sphi 0, %s72
      %s75 = sphi 0, %s74
      %s89 = sphi 0, %s75
      %s93 = sphi 0, %s93
      %s95 = sphi 0, %s93
      %s96 = sphi 0, %s95
      %s110 = sphi 0, %s96
      %s114 = sphi 0, %s114
      %s116 = sphi 0, %s114
      %s117 = sphi 0, %s116
      %s131 = sphi 0, %s117
      %s135 = sphi 0, %s135
      %s137 = sphi 0, %s135
      %s138 = sphi 0, %s137
      %s152 = sphi 0, %s138
      %s160 = sphi 0, %s162
      %s163 = sphi 0, %s160
      %s164 = sphi 0, %s163
      %s180 = sphi 0, %s164
      %s188 = sphi 0, %s190
      %s191 = sphi 0, %s188
      %s192 = sphi 0, %s191
      %s208 = sphi 0, %s192
      %s216 = sphi 0, %s218
      %s219 = sphi 0, %s216
      %s220 = sphi 0, %s219
      %s236 = sphi 0, %s220
    $region4: #{tpu_custom_call.1} parent=1 // loop_header_branch
      %27 = sbr.rel (%p25) target = $region8
    $region5: #{tpu_custom_call.1} parent=1 // loop_body
      %s29 = ssub.s32 %s24, 1
      %s30 = ssub.s32 %s24, 2
      %s37 = sadd.s32 1, %s32
      %p38 = scmp.ge.s32.totalorder %s37, 2
      %s39 = scalar_select %p38, 0, %s37
      %s40 = sadd.s32 1, %s31
      %s41 = scalar_select %p38, %s40, %s31
      %p42 = scmp.ge.s32.totalorder %s41, 4
      %s43 = scalar_select %p42, 0, %s41
      %s44 = ssub.s32 %s31, %s43
      %s45 = ssub.s32 %s32, %s39
      %s46 = sor.u32 %s44, %s45
      %p47 = scmp.eq.s32.totalorder %s46, 0
      %s49 = sadd.s32 %s48, 1
      %s50 = scalar_select %p47, %s48, %s49
      %p53 = pneg %p47
      %p54 = scmp.eq.s32.totalorder %s24, 7
      %p55 = por %p53, %p54
      %p56 = scmp.ne.s32.totalorder %s48, %s51
      %p57 = scmp.eq.s32.totalorder %s24, 0
      %p58 = por %p56, %p57
      %p59 = scmp.ne.s32.totalorder %s48, %s51
      %p60 = scmp.eq.s32.totalorder %s29, 7
      %p61 = por %p59, %p60
      %p62 = scmp.ne.s32.totalorder %s51, %s52
      %p63 = scmp.eq.s32.totalorder %s29, 0
      %p64 = por %p62, %p63
      %p65 = scmp.ne.s32.totalorder %s51, %s52
      %p66 = scmp.eq.s32.totalorder %s30, 7
      %p67 = por %p65, %p66
      %p69 = scmp.ne.s32.totalorder %s52, %s68
      %p70 = scmp.eq.s32.totalorder %s30, 0
      %p71 = por %p69, %p70
      %s73 = sadd.s32 %s72, 1
      %p76 = scmp.eq.s32.totalorder %s24, 7
      %p77 = scmp.ne.s32.totalorder %s72, %s74
      %p78 = scmp.eq.s32.totalorder %s24, 0
      %p79 = por %p77, %p78
      %p80 = scmp.ne.s32.totalorder %s72, %s74
      %p81 = scmp.eq.s32.totalorder %s29, 7
      %p82 = por %p80, %p81
      %p83 = scmp.ne.s32.totalorder %s74, %s75
      %p84 = scmp.eq.s32.totalorder %s29, 0
      %p85 = por %p83, %p84
      %p86 = scmp.ne.s32.totalorder %s74, %s75
      %p87 = scmp.eq.s32.totalorder %s30, 7
      %p88 = por %p86, %p87
      %p90 = scmp.ne.s32.totalorder %s75, %s89
      %p91 = scmp.eq.s32.totalorder %s30, 0
      %p92 = por %p90, %p91
      %s94 = sadd.s32 %s93, 1
      %p97 = scmp.eq.s32.totalorder %s24, 7
      %p98 = scmp.ne.s32.totalorder %s93, %s95
      %p99 = scmp.eq.s32.totalorder %s24, 0
      %p100 = por %p98, %p99
      %p101 = scmp.ne.s32.totalorder %s93, %s95
      %p102 = scmp.eq.s32.totalorder %s29, 7
      %p103 = por %p101, %p102
      %p104 = scmp.ne.s32.totalorder %s95, %s96
      %p105 = scmp.eq.s32.totalorder %s29, 0
      %p106 = por %p104, %p105
      %p107 = scmp.ne.s32.totalorder %s95, %s96
      %p108 = scmp.eq.s32.totalorder %s30, 7
      %p109 = por %p107, %p108
      %p111 = scmp.ne.s32.totalorder %s96, %s110
      %p112 = scmp.eq.s32.totalorder %s30, 0
      %p113 = por %p111, %p112
      %s115 = sadd.s32 %s114, 1
      %p118 = scmp.eq.s32.totalorder %s24, 7
      %p119 = scmp.ne.s32.totalorder %s114, %s116
      %p120 = scmp.eq.s32.totalorder %s24, 0
      %p121 = por %p119, %p120
      %p122 = scmp.ne.s32.totalorder %s114, %s116
      %p123 = scmp.eq.s32.totalorder %s29, 7
      %p124 = por %p122, %p123
      %p125 = scmp.ne.s32.totalorder %s116, %s117
      %p126 = scmp.eq.s32.totalorder %s29, 0
      %p127 = por %p125, %p126
      %p128 = scmp.ne.s32.totalorder %s116, %s117
      %p129 = scmp.eq.s32.totalorder %s30, 7
      %p130 = por %p128, %p129
      %p132 = scmp.ne.s32.totalorder %s117, %s131
      %p133 = scmp.eq.s32.totalorder %s30, 0
      %p134 = por %p132, %p133
      %s136 = sadd.s32 %s135, 1
      %p139 = scmp.eq.s32.totalorder %s24, 7
      %p140 = scmp.ne.s32.totalorder %s135, %s137
      %p141 = scmp.eq.s32.totalorder %s24, 0
      %p142 = por %p140, %p141
      %p143 = scmp.ne.s32.totalorder %s135, %s137
      %p144 = scmp.eq.s32.totalorder %s29, 7
      %p145 = por %p143, %p144
      %p146 = scmp.ne.s32.totalorder %s137, %s138
      %p147 = scmp.eq.s32.totalorder %s29, 0
      %p148 = por %p146, %p147
      %p149 = scmp.ne.s32.totalorder %s137, %s138
      %p150 = scmp.eq.s32.totalorder %s30, 7
      %p151 = por %p149, %p150
      %p153 = scmp.ne.s32.totalorder %s138, %s152
      %p154 = scmp.eq.s32.totalorder %s30, 0
      %p155 = por %p153, %p154
      %s156 = ssub.s32 %s31, %s43
      %s157 = ssub.s32 %s32, %s39
      %s158 = sor.u32 %s156, %s157
      %p159 = scmp.eq.s32.totalorder %s158, 0
      %s161 = sadd.s32 %s160, 1
      %s162 = scalar_select %p159, %s160, %s161
      %p165 = pneg %p159
      %p166 = scmp.eq.s32.totalorder %s24, 7
      %p167 = por %p165, %p166
      %p168 = scmp.ne.s32.totalorder %s160, %s163
      %p169 = scmp.eq.s32.totalorder %s24, 0
      %p170 = por %p168, %p169
      %p171 = scmp.ne.s32.totalorder %s160, %s163
      %p172 = scmp.eq.s32.totalorder %s29, 7
      %p173 = por %p171, %p172
      %p174 = scmp.ne.s32.totalorder %s163, %s164
      %p175 = scmp.eq.s32.totalorder %s29, 0
      %p176 = por %p174, %p175
      %p177 = scmp.ne.s32.totalorder %s163, %s164
      %p178 = scmp.eq.s32.totalorder %s30, 7
      %p179 = por %p177, %p178
      %p181 = scmp.ne.s32.totalorder %s164, %s180
      %p182 = scmp.eq.s32.totalorder %s30, 0
      %p183 = por %p181, %p182
      %s184 = ssub.s32 %s31, %s43
      %s185 = ssub.s32 %s32, %s39
      %s186 = sor.u32 %s184, %s185
      %p187 = scmp.eq.s32.totalorder %s186, 0
      %s189 = sadd.s32 %s188, 1
      %s190 = scalar_select %p187, %s188, %s189
      %p193 = pneg %p187
      %p194 = scmp.eq.s32.totalorder %s24, 7
      %p195 = por %p193, %p194
      %p196 = scmp.ne.s32.totalorder %s188, %s191
      %p197 = scmp.eq.s32.totalorder %s24, 0
      %p198 = por %p196, %p197
      %p199 = scmp.ne.s32.totalorder %s188, %s191
      %p200 = scmp.eq.s32.totalorder %s29, 7
      %p201 = por %p199, %p200
      %p202 = scmp.ne.s32.totalorder %s191, %s192
      %p203 = scmp.eq.s32.totalorder %s29, 0
      %p204 = por %p202, %p203
      %p205 = scmp.ne.s32.totalorder %s191, %s192
      %p206 = scmp.eq.s32.totalorder %s30, 7
      %p207 = por %p205, %p206
      %p209 = scmp.ne.s32.totalorder %s192, %s208
      %p210 = scmp.eq.s32.totalorder %s30, 0
      %p211 = por %p209, %p210
      %s212 = ssub.s32 %s31, %s43
      %s213 = ssub.s32 %s32, %s39
      %s214 = sor.u32 %s212, %s213
      %p215 = scmp.eq.s32.totalorder %s214, 0
      %s217 = sadd.s32 %s216, 1
      %s218 = scalar_select %p215, %s216, %s217
      %p221 = pneg %p215
      %p222 = scmp.eq.s32.totalorder %s24, 7
      %p223 = por %p221, %p222
      %p224 = scmp.ne.s32.totalorder %s216, %s219
      %p225 = scmp.eq.s32.totalorder %s24, 0
      %p226 = por %p224, %p225
      %p227 = scmp.ne.s32.totalorder %s216, %s219
      %p228 = scmp.eq.s32.totalorder %s29, 7
      %p229 = por %p227, %p228
      %p230 = scmp.ne.s32.totalorder %s219, %s220
      %p231 = scmp.eq.s32.totalorder %s29, 0
      %p232 = por %p230, %p231
      %p233 = scmp.ne.s32.totalorder %s219, %s220
      %p234 = scmp.eq.s32.totalorder %s30, 7
      %p235 = por %p233, %p234
      %p237 = scmp.ne.s32.totalorder %s220, %s236
      %p238 = scmp.eq.s32.totalorder %s30, 0
      %p239 = por %p237, %p238
      %p240 = scmp.le.s32.totalorder 1, %s24
      %p241 = scmp.lt.s32.totalorder %s24, 9
      %p242 = pnand %p240, %p241
      %p243 = pneg %p242
      // Predicated region
      $region9: #{tpu_custom_call.1} parent=5 // pred_check
        _
      $region10: #{tpu_custom_call.1} parent=5 // pred_check_branch
        %245 = sbr.rel (%p242) target = $region12
      $region11: #{tpu_custom_call.1} parent=5 // pred_region
        %s246 = ssub.s32 %s24, 1
        // Predicated region
        $region13: #{tpu_custom_call.1} parent=11 // pred_check
          %p247 = pneg %p85
        $region14: #{tpu_custom_call.1} parent=11 // pred_check_branch
          %249 = sbr.rel (%p247) target = $region16
        $region15: #{tpu_custom_call.1} parent=11 // pred_region
          _
        $region16: #{tpu_custom_call.1} parent=11 // pred_fallthru
          _
        // Predicated region
        $region17: #{tpu_custom_call.1} parent=11 // pred_check
          %p250 = pneg %p106
        $region18: #{tpu_custom_call.1} parent=11 // pred_check_branch
          %252 = sbr.rel (%p250) target = $region20
        $region19: #{tpu_custom_call.1} parent=11 // pred_region
          _
        $region20: #{tpu_custom_call.1} parent=11 // pred_fallthru
          _
        // Predicated region
        $region21: #{tpu_custom_call.1} parent=11 // pred_check
          %p253 = pneg %p127
        $region22: #{tpu_custom_call.1} parent=11 // pred_check_branch
          %255 = sbr.rel (%p253) target = $region24
        $region23: #{tpu_custom_call.1} parent=11 // pred_region
          %s257 = ssub.s32 3072, 3072
          %258 = vsyncadd [#allocation6], %s257
          %s259 = sshll.u32 [#allocation5], 4
          %s260 = int_to_ptr.vmem [resolvable:$true] %s259
          %265 = dma.hbm_to_vmem [thread:$0]  %s3, 3072, %s260, [#allocation6], 192, 192, 12
        $region24: #{tpu_custom_call.1} parent=11 // pred_fallthru
          _
        // Predicated region
        $region25: #{tpu_custom_call.1} parent=11 // pred_check
          %p266 = pneg %p148
        $region26: #{tpu_custom_call.1} parent=11 // pred_check_branch
          %268 = sbr.rel (%p266) target = $region28
        $region27: #{tpu_custom_call.1} parent=11 // pred_region
          _
        $region28: #{tpu_custom_call.1} parent=11 // pred_fallthru
          _
      $region12: #{tpu_custom_call.1} parent=5 // pred_fallthru
        _
      %p269 = scmp.lt.s32.totalorder %s24, 8
      // Predicated region
      $region29: #{tpu_custom_call.1} parent=5 // pred_check
        %p270 = pneg %p269
      $region30: #{tpu_custom_call.1} parent=5 // pred_check_branch
        %272 = sbr.rel (%p270) target = $region32
      $region31: #{tpu_custom_call.1} parent=5 // pred_region
        // Predicated region
        $region33: #{tpu_custom_call.1} parent=31 // pred_check
          %p273 = pneg %p58
        $region34: #{tpu_custom_call.1} parent=31 // pred_check_branch
          %275 = sbr.rel (%p273) target = $region36
        $region35: #{tpu_custom_call.1} parent=31 // pred_region
          %s276 = sand.u32 %s48, 1
          %s277 = scalar_lea.sflag [#allocation3], %s276
          %s278 = sand.u32 %s48, 1
          %s279 = smul.addr %s278, 128
          %s280 = scalar_lea.vmem [#allocation2], %s279
          %s281 = smul.u32 16, %s32
          %s283 = ssub.s32 2048, 2048
          %284 = vsyncadd %s277, %s283
          %s285 = smul.addr %s31, 32
          %s286 = sadd.s32 %s281, %s285
          %s287 = smul.addr %s286, 128
          %s288 = scalar_lea.hbm %s0, %s287
          %s289 = sshll.u32 %s280, 4
          %s290 = int_to_ptr.vmem [resolvable:$true] %s289
          %295 = dma.hbm_to_vmem [thread:$0]  %s288, 2048, %s290, %s277, 128, 128, 8
        $region36: #{tpu_custom_call.1} parent=31 // pred_fallthru
          _
      $region32: #{tpu_custom_call.1} parent=5 // pred_fallthru
        _
      %p296 = scmp.le.s32.totalorder 1, %s24
      %p297 = scmp.lt.s32.totalorder %s24, 9
      %p298 = pnand %p296, %p297
      %p299 = pneg %p298
      // Predicated region
      $region37: #{tpu_custom_call.1} parent=5 // pred_check
        _
      $region38: #{tpu_custom_call.1} parent=5 // pred_check_branch
        %301 = sbr.rel (%p298) target = $region40
      $region39: #{tpu_custom_call.1} parent=5 // pred_region
        %s302 = ssub.s32 %s24, 1
        %s303 = sand.u32 %s51, 1
        %s304 = scalar_lea.sflag [#allocation3], %s303
        %s305 = sand.u32 %s51, 1
        %s306 = smul.addr %s305, 128
        %s307 = scalar_lea.vmem [#allocation2], %s306
        // Predicated region
        $region41: #{tpu_custom_call.1} parent=39 // pred_check
          %p308 = pneg %p64
        $region42: #{tpu_custom_call.1} parent=39 // pred_check_branch
          %310 = sbr.rel (%p308) target = $region44
        $region43: #{tpu_custom_call.1} parent=39 // pred_region
          %311 = dma.done %s304, 2048
        $region44: #{tpu_custom_call.1} parent=39 // pred_fallthru
          _
        // Predicated region
        $region45: #{tpu_custom_call.1} parent=39 // pred_check
          %p312 = pneg %p127
        $region46: #{tpu_custom_call.1} parent=39 // pred_check_branch
          %314 = sbr.rel (%p312) target = $region48
        $region47: #{tpu_custom_call.1} parent=39 // pred_region
          %315 = dma.done [#allocation6], 3072
        $region48: #{tpu_custom_call.1} parent=39 // pred_fallthru
          _
        %s316 = sand.u32 %s51, 1
        %s317 = scalar_lea.sflag [#allocation3], %s316
        %s318 = sand.u32 %s51, 1
        %s319 = smul.addr %s318, 128
        %s320 = scalar_lea.vmem [#allocation2], %s319
        %p321 = pneg %p64
        %p322 = pneg %p61
        %p323 = pneg %p85
        %p324 = pneg %p82
        %p325 = pneg %p106
        %p326 = pneg %p103
        %p327 = pneg %p127
        %p328 = pneg %p124
        %p329 = pneg %p148
        %p330 = pneg %p145
        %p331 = pneg %p176
        %p332 = pneg %p173
        %s333 = sand.u32 %s163, 1
        %s334 = scalar_lea.sflag [#allocation4], %s333
        %s335 = sand.u32 %s163, 1
        %s336 = smul.addr %s335, 64
        %s337 = scalar_lea.vmem [#allocation7], %s336
        %p338 = pneg %p204
        %p339 = pneg %p201
        %s340 = sand.u32 %s29, 1
        %s341 = scalar_lea.sflag [#allocation9], %s340
        %s342 = sand.u32 %s191, 1
        %s343 = smul.addr %s342, 64
        %s344 = scalar_lea.vmem [#allocation8], %s343
        %p345 = pneg %p232
        %p346 = pneg %p229
        %s347 = sand.u32 %s29, 1
        %s348 = scalar_lea.sflag [#allocation9], %s347
        %s349 = sand.u32 %s219, 1
        %s350 = smul.addr %s349, 64
        %s351 = scalar_lea.vmem [#allocation10], %s350
        %s352 = smul.u32 16, %s34
        %s353 = smul.u32 16, %s34
        %v355 = vld [vmem:[%s307] sm:$0xff]
        %v356 = vld [vmem:[%s307 + $0x8] sm:$0xff]
        %v357 = vld [vmem:[%s307 + $0x10] sm:$0xff]
        %v358 = vld [vmem:[%s307 + $0x18] sm:$0xff]
        %v359 = vld [vmem:[%s307 + $0x20] sm:$0xff]
        %v360 = vld [vmem:[%s307 + $0x28] sm:$0xff]
        %v361 = vld [vmem:[%s307 + $0x30] sm:$0xff]
        %v362 = vld [vmem:[%s307 + $0x38] sm:$0xff]
        %v363 = vld [vmem:[%s307 + $0x40] sm:$0xff]
        %v364 = vld [vmem:[%s307 + $0x48] sm:$0xff]
        %v365 = vld [vmem:[%s307 + $0x50] sm:$0xff]
        %v366 = vld [vmem:[%s307 + $0x58] sm:$0xff]
        %v367 = vld [vmem:[%s307 + $0x60] sm:$0xff]
        %v368 = vld [vmem:[%s307 + $0x68] sm:$0xff]
        %v369 = vld [vmem:[%s307 + $0x70] sm:$0xff]
        %v370 = vld [vmem:[%s307 + $0x78] sm:$0xff]
        %v371 = vld [vmem:[%s1] sm:$0x1]
        %v372 = vld [vmem:[%s2] sm:$0x1]
        %373 = vadd.xlane.f32.xlu0 %v355
        %v374 = vpop.xlane.xlu0 %373
        %375 = vadd.xlane.f32.xlu0 %v356
        %v376 = vpop.xlane.xlu0 %375
        %377 = vadd.xlane.f32.xlu0 %v357
        %v378 = vpop.xlane.xlu0 %377
        %379 = vadd.xlane.f32.xlu0 %v358
        %v380 = vpop.xlane.xlu0 %379
        %381 = vadd.xlane.f32.xlu0 %v359
        %v382 = vpop.xlane.xlu0 %381
        %383 = vadd.xlane.f32.xlu0 %v360
        %v384 = vpop.xlane.xlu0 %383
        %385 = vadd.xlane.f32.xlu0 %v361
        %v386 = vpop.xlane.xlu0 %385
        %387 = vadd.xlane.f32.xlu0 %v362
        %v388 = vpop.xlane.xlu0 %387
        %389 = vadd.xlane.f32.xlu0 %v363
        %v390 = vpop.xlane.xlu0 %389
        %391 = vadd.xlane.f32.xlu0 %v364
        %v392 = vpop.xlane.xlu0 %391
        %393 = vadd.xlane.f32.xlu0 %v365
        %v394 = vpop.xlane.xlu0 %393
        %395 = vadd.xlane.f32.xlu0 %v366
        %v396 = vpop.xlane.xlu0 %395
        %397 = vadd.xlane.f32.xlu0 %v367
        %v398 = vpop.xlane.xlu0 %397
        %399 = vadd.xlane.f32.xlu0 %v368
        %v400 = vpop.xlane.xlu0 %399
        %401 = vadd.xlane.f32.xlu0 %v369
        %v402 = vpop.xlane.xlu0 %401
        %403 = vadd.xlane.f32.xlu0 %v370
        %v404 = vpop.xlane.xlu0 %403
        %v405 = vrcp.pop 128.0
        %v406 = vmul.f32 %v374, %v405
        %v407 = vmul.f32 %v376, %v405
        %v408 = vmul.f32 %v378, %v405
        %v409 = vmul.f32 %v380, %v405
        %v410 = vmul.f32 %v382, %v405
        %v411 = vmul.f32 %v384, %v405
        %v412 = vmul.f32 %v386, %v405
        %v413 = vmul.f32 %v388, %v405
        %v414 = vmul.f32 %v390, %v405
        %v415 = vmul.f32 %v392, %v405
        %v416 = vmul.f32 %v394, %v405
        %v417 = vmul.f32 %v396, %v405
        %v418 = vmul.f32 %v398, %v405
        %v419 = vmul.f32 %v400, %v405
        %v420 = vmul.f32 %v402, %v405
        %v421 = vmul.f32 %v404, %v405
        %v422 = vsub.f32 %v355, %v406
        %v423 = vsub.f32 %v356, %v407
        %v424 = vsub.f32 %v357, %v408
        %v425 = vsub.f32 %v358, %v409
        %v426 = vsub.f32 %v359, %v410
        %v427 = vsub.f32 %v360, %v411
        %v428 = vsub.f32 %v361, %v412
        %v429 = vsub.f32 %v362, %v413
        %v430 = vsub.f32 %v363, %v414
        %v431 = vsub.f32 %v364, %v415
        %v432 = vsub.f32 %v365, %v416
        %v433 = vsub.f32 %v366, %v417
        %v434 = vsub.f32 %v367, %v418
        %v435 = vsub.f32 %v368, %v419
        %v436 = vsub.f32 %v369, %v420
        %v437 = vsub.f32 %v370, %v421
        %v438 = vmul.f32 %v422, %v422
        %v439 = vmul.f32 %v423, %v423
        %v440 = vmul.f32 %v424, %v424
        %v441 = vmul.f32 %v425, %v425
        %v442 = vmul.f32 %v426, %v426
        %v443 = vmul.f32 %v427, %v427
        %v444 = vmul.f32 %v428, %v428
        %v445 = vmul.f32 %v429, %v429
        %v446 = vmul.f32 %v430, %v430
        %v447 = vmul.f32 %v431, %v431
        %v448 = vmul.f32 %v432, %v432
        %v449 = vmul.f32 %v433, %v433
        %v450 = vmul.f32 %v434, %v434
        %v451 = vmul.f32 %v435, %v435
        %v452 = vmul.f32 %v436, %v436
        %v453 = vmul.f32 %v437, %v437
        %454 = vadd.xlane.f32.xlu0 %v438
        %v455 = vpop.xlane.xlu0 %454
        %456 = vadd.xlane.f32.xlu0 %v439
        %v457 = vpop.xlane.xlu0 %456
        %458 = vadd.xlane.f32.xlu0 %v440
        %v459 = vpop.xlane.xlu0 %458
        %460 = vadd.xlane.f32.xlu0 %v441
        %v461 = vpop.xlane.xlu0 %460
        %462 = vadd.xlane.f32.xlu0 %v442
        %v463 = vpop.xlane.xlu0 %462
        %464 = vadd.xlane.f32.xlu0 %v443
        %v465 = vpop.xlane.xlu0 %464
        %466 = vadd.xlane.f32.xlu0 %v444
        %v467 = vpop.xlane.xlu0 %466
        %468 = vadd.xlane.f32.xlu0 %v445
        %v469 = vpop.xlane.xlu0 %468
        %470 = vadd.xlane.f32.xlu0 %v446
        %v471 = vpop.xlane.xlu0 %470
        %472 = vadd.xlane.f32.xlu0 %v447
        %v473 = vpop.xlane.xlu0 %472
        %474 = vadd.xlane.f32.xlu0 %v448
        %v475 = vpop.xlane.xlu0 %474
        %476 = vadd.xlane.f32.xlu0 %v449
        %v477 = vpop.xlane.xlu0 %476
        %478 = vadd.xlane.f32.xlu0 %v450
        %v479 = vpop.xlane.xlu0 %478
        %480 = vadd.xlane.f32.xlu0 %v451
        %v481 = vpop.xlane.xlu0 %480
        %482 = vadd.xlane.f32.xlu0 %v452
        %v483 = vpop.xlane.xlu0 %482
        %484 = vadd.xlane.f32.xlu0 %v453
        %v485 = vpop.xlane.xlu0 %484
        %v486 = vmul.f32 %v455, %v405
        %v487 = vmul.f32 %v457, %v405
        %v488 = vmul.f32 %v459, %v405
        %v489 = vmul.f32 %v461, %v405
        %v490 = vmul.f32 %v463, %v405
        %v491 = vmul.f32 %v465, %v405
        %v492 = vmul.f32 %v467, %v405
        %v493 = vmul.f32 %v469, %v405
        %v494 = vmul.f32 %v471, %v405
        %v495 = vmul.f32 %v473, %v405
        %v496 = vmul.f32 %v475, %v405
        %v497 = vmul.f32 %v477, %v405
        %v498 = vmul.f32 %v479, %v405
        %v499 = vmul.f32 %v481, %v405
        %v500 = vmul.f32 %v483, %v405
        %v501 = vmul.f32 %v485, %v405
        %v502 = vadd.f32 %v486, 1e-05
        %v503 = vadd.f32 %v487, 1e-05
        %v504 = vadd.f32 %v488, 1e-05
        %v505 = vadd.f32 %v489, 1e-05
        %v506 = vadd.f32 %v490, 1e-05
        %v507 = vadd.f32 %v491, 1e-05
        %v508 = vadd.f32 %v492, 1e-05
        %v509 = vadd.f32 %v493, 1e-05
        %v510 = vadd.f32 %v494, 1e-05
        %v511 = vadd.f32 %v495, 1e-05
        %v512 = vadd.f32 %v496, 1e-05
        %v513 = vadd.f32 %v497, 1e-05
        %v514 = vadd.f32 %v498, 1e-05
        %v515 = vadd.f32 %v499, 1e-05
        %v516 = vadd.f32 %v500, 1e-05
        %v517 = vadd.f32 %v501, 1e-05
        %v518 = vrsqrt.pop %v502
        %v519 = vrsqrt.pop %v503
        %v520 = vrsqrt.pop %v504
        %v521 = vrsqrt.pop %v505
        %v522 = vrsqrt.pop %v506
        %v523 = vrsqrt.pop %v507
        %v524 = vrsqrt.pop %v508
        %v525 = vrsqrt.pop %v509
        %v526 = vrsqrt.pop %v510
        %v527 = vrsqrt.pop %v511
        %v528 = vrsqrt.pop %v512
        %v529 = vrsqrt.pop %v513
        %v530 = vrsqrt.pop %v514
        %v531 = vrsqrt.pop %v515
        %v532 = vrsqrt.pop %v516
        %v533 = vrsqrt.pop %v517
        %v534 = vmul.f32 %v422, %v518
        %v535 = vmul.f32 %v423, %v519
        %v536 = vmul.f32 %v424, %v520
        %v537 = vmul.f32 %v425, %v521
        %v538 = vmul.f32 %v426, %v522
        %v539 = vmul.f32 %v427, %v523
        %v540 = vmul.f32 %v428, %v524
        %v541 = vmul.f32 %v429, %v525
        %v542 = vmul.f32 %v430, %v526
        %v543 = vmul.f32 %v431, %v527
        %v544 = vmul.f32 %v432, %v528
        %v545 = vmul.f32 %v433, %v529
        %v546 = vmul.f32 %v434, %v530
        %v547 = vmul.f32 %v435, %v531
        %v548 = vmul.f32 %v436, %v532
        %v549 = vmul.f32 %v437, %v533
        %v551 = vlaneseq
        %v552 = vshrl.u32 %v551, 7
        %v553 = vsub.s32 0, %v552
        %v554 = vrot.slane %v371, %v553
        %v556 = vmul.f32 %v534, %v554
        %v557 = vmul.f32 %v535, %v554
        %v558 = vmul.f32 %v536, %v554
        %v559 = vmul.f32 %v537, %v554
        %v560 = vmul.f32 %v538, %v554
        %v561 = vmul.f32 %v539, %v554
        %v562 = vmul.f32 %v540, %v554
        %v563 = vmul.f32 %v541, %v554
        %v564 = vmul.f32 %v542, %v554
        %v565 = vmul.f32 %v543, %v554
        %v566 = vmul.f32 %v544, %v554
        %v567 = vmul.f32 %v545, %v554
        %v568 = vmul.f32 %v546, %v554
        %v569 = vmul.f32 %v547, %v554
        %v570 = vmul.f32 %v548, %v554
        %v571 = vmul.f32 %v549, %v554
        %v573 = vlaneseq
        %v574 = vshrl.u32 %v573, 7
        %v575 = vsub.s32 0, %v574
        %v576 = vrot.slane %v372, %v575
        %v578 = vadd.f32 %v556, %v576
        %v579 = vadd.f32 %v557, %v576
        %v580 = vadd.f32 %v558, %v576
        %v581 = vadd.f32 %v559, %v576
        %v582 = vadd.f32 %v560, %v576
        %v583 = vadd.f32 %v561, %v576
        %v584 = vadd.f32 %v562, %v576
        %v585 = vadd.f32 %v563, %v576
        %v586 = vadd.f32 %v564, %v576
        %v587 = vadd.f32 %v565, %v576
        %v588 = vadd.f32 %v566, %v576
        %v589 = vadd.f32 %v567, %v576
        %v590 = vadd.f32 %v568, %v576
        %v591 = vadd.f32 %v569, %v576
        %v592 = vadd.f32 %v570, %v576
        %v593 = vadd.f32 %v571, %v576
        %v594 = vpack.c.bf16 %v579, %v578
        %v595 = vpack.c.bf16 %v581, %v580
        %v596 = vpack.c.bf16 %v583, %v582
        %v597 = vpack.c.bf16 %v585, %v584
        %v598 = vpack.c.bf16 %v587, %v586
        %v599 = vpack.c.bf16 %v589, %v588
        %v600 = vpack.c.bf16 %v591, %v590
        %v601 = vpack.c.bf16 %v593, %v592
        %v602 = vld [vmem:[#allocation5] sm:$0xff]
        %v603 = vld [vmem:[#allocation5 + $0x8] sm:$0xf]
        %v604 = vld [vmem:[#allocation5 + $0xc] sm:$0xff]
        %v605 = vld [vmem:[#allocation5 + $0x14] sm:$0xf]
        %v606 = vld [vmem:[#allocation5 + $0x18] sm:$0xff]
        %v607 = vld [vmem:[#allocation5 + $0x20] sm:$0xf]
        %v608 = vld [vmem:[#allocation5 + $0x24] sm:$0xff]
        %v609 = vld [vmem:[#allocation5 + $0x2c] sm:$0xf]
        %v610 = vld [vmem:[#allocation5 + $0x30] sm:$0xff]
        %v611 = vld [vmem:[#allocation5 + $0x38] sm:$0xf]
        %v612 = vld [vmem:[#allocation5 + $0x3c] sm:$0xff]
        %v613 = vld [vmem:[#allocation5 + $0x44] sm:$0xf]
        %v614 = vld [vmem:[#allocation5 + $0x48] sm:$0xff]
        %v615 = vld [vmem:[#allocation5 + $0x50] sm:$0xf]
        %v616 = vld [vmem:[#allocation5 + $0x54] sm:$0xff]
        %v617 = vld [vmem:[#allocation5 + $0x5c] sm:$0xf]
        %v618 = vld [vmem:[#allocation5 + $0x60] sm:$0xff]
        %v619 = vld [vmem:[#allocation5 + $0x68] sm:$0xf]
        %v620 = vld [vmem:[#allocation5 + $0x6c] sm:$0xff]
        %v621 = vld [vmem:[#allocation5 + $0x74] sm:$0xf]
        %v622 = vld [vmem:[#allocation5 + $0x78] sm:$0xff]
        %v623 = vld [vmem:[#allocation5 + $0x80] sm:$0xf]
        %v624 = vld [vmem:[#allocation5 + $0x84] sm:$0xff]
        %v625 = vld [vmem:[#allocation5 + $0x8c] sm:$0xf]
        %v626 = vld [vmem:[#allocation5 + $0x90] sm:$0xff]
        %v627 = vld [vmem:[#allocation5 + $0x98] sm:$0xf]
        %v628 = vld [vmem:[#allocation5 + $0x9c] sm:$0xff]
        %v629 = vld [vmem:[#allocation5 + $0xa4] sm:$0xf]
        %v630 = vld [vmem:[#allocation5 + $0xa8] sm:$0xff]
        %v631 = vld [vmem:[#allocation5 + $0xb0] sm:$0xf]
        %v632 = vld [vmem:[#allocation5 + $0xb4] sm:$0xff]
        %v633 = vld [vmem:[#allocation5 + $0xbc] sm:$0xf]
        %v634 = vld [vmem:[%s4] sm:$0x7]
        %v636 = vlaneseq
        %v637 = vshrl.u32 %v636, 7
        %v638 = vsub.s32 0, %v637
        %v639 = vrot.slane %v634, %v638
        %v640 = vlaneseq
        %v641 = vshrl.u32 %v640, 7
        %v642 = vsub.s32 1, %v641
        %v643 = vrot.slane %v634, %v642
        %v644 = vlaneseq
        %v645 = vshrl.u32 %v644, 7
        %v646 = vsub.s32 2, %v645
        %v647 = vrot.slane %v634, %v646
        %v683 = vunpack.c.l.b16 %v602
        %v684 = vunpack.c.h.b16 %v602
        %v685 = vunpack.c.l.b16 %v603
        %v686 = vunpack.c.l.b16 %v604
        %v687 = vunpack.c.h.b16 %v604
        %v688 = vunpack.c.l.b16 %v605
        %v689 = vunpack.c.l.b16 %v606
        %v690 = vunpack.c.h.b16 %v606
        %v691 = vunpack.c.l.b16 %v607
        %v692 = vunpack.c.l.b16 %v608
        %v693 = vunpack.c.h.b16 %v608
        %v694 = vunpack.c.l.b16 %v609
        %v695 = vunpack.c.l.b16 %v610
        %v696 = vunpack.c.h.b16 %v610
        %v697 = vunpack.c.l.b16 %v611
        %v698 = vunpack.c.l.b16 %v612
        %v699 = vunpack.c.h.b16 %v612
        %v700 = vunpack.c.l.b16 %v613
        %v701 = vunpack.c.l.b16 %v614
        %v702 = vunpack.c.h.b16 %v614
        %v703 = vunpack.c.l.b16 %v615
        %v704 = vunpack.c.l.b16 %v616
        %v705 = vunpack.c.h.b16 %v616
        %v706 = vunpack.c.l.b16 %v617
        %v707 = vunpack.c.l.b16 %v618
        %v708 = vunpack.c.h.b16 %v618
        %v709 = vunpack.c.l.b16 %v619
        %v710 = vunpack.c.l.b16 %v620
        %v711 = vunpack.c.h.b16 %v620
        %v712 = vunpack.c.l.b16 %v621
        %v713 = vunpack.c.l.b16 %v622
        %v714 = vunpack.c.h.b16 %v622
        %v715 = vunpack.c.l.b16 %v623
        %v716 = vunpack.c.l.b16 %v624
        %v717 = vunpack.c.h.b16 %v624
        %v718 = vunpack.c.l.b16 %v625
        %v719 = vunpack.c.l.b16 %v626
        %v720 = vunpack.c.h.b16 %v626
        %v721 = vunpack.c.l.b16 %v627
        %v722 = vunpack.c.l.b16 %v628
        %v723 = vunpack.c.h.b16 %v628
        %v724 = vunpack.c.l.b16 %v629
        %v725 = vunpack.c.l.b16 %v630
        %v726 = vunpack.c.h.b16 %v630
        %v727 = vunpack.c.l.b16 %v631
        %v728 = vunpack.c.l.b16 %v632
        %v729 = vunpack.c.h.b16 %v632
        %v730 = vunpack.c.l.b16 %v633
        %v731 = vpack.c.b16 %v686, %v683
        %v732 = vpack.c.b16 %v687, %v684
        %v733 = vpack.c.b16 %v688, %v685
        %v734 = vpack.c.b16 %v692, %v689
        %v735 = vpack.c.b16 %v693, %v690
        %v736 = vpack.c.b16 %v694, %v691
        %v737 = vpack.c.b16 %v698, %v695
        %v738 = vpack.c.b16 %v699, %v696
        %v739 = vpack.c.b16 %v700, %v697
        %v740 = vpack.c.b16 %v704, %v701
        %v741 = vpack.c.b16 %v705, %v702
        %v742 = vpack.c.b16 %v706, %v703
        %v743 = vpack.c.b16 %v710, %v707
        %v744 = vpack.c.b16 %v711, %v708
        %v745 = vpack.c.b16 %v712, %v709
        %v746 = vpack.c.b16 %v716, %v713
        %v747 = vpack.c.b16 %v717, %v714
        %v748 = vpack.c.b16 %v718, %v715
        %v749 = vpack.c.b16 %v722, %v719
        %v750 = vpack.c.b16 %v723, %v720
        %v751 = vpack.c.b16 %v724, %v721
        %v752 = vpack.c.b16 %v728, %v725
        %v753 = vpack.c.b16 %v729, %v726
        %v754 = vpack.c.b16 %v730, %v727
        %779 = vmatprep.subr.bf16.mxu0 %v732
        %780 = vmatpush1.bf16.msra.mxu0 %v731
        %781 = vmatprep.subr.bf16.mxu0 %v735
        %782 = vmatpush1.bf16.msra.mxu0 %v734
        %783 = vmatprep.subr.bf16.mxu0 %v738
        %784 = vmatpush1.bf16.msra.mxu0 %v737
        %785 = vmatprep.subr.bf16.mxu0 %v741
        %786 = vmatpush1.bf16.msra.mxu0 %v740
        %787 = vmatprep.subr.bf16.mxu0 %v744
        %788 = vmatpush1.bf16.msra.mxu0 %v743
        %789 = vmatprep.subr.bf16.mxu0 %v747
        %790 = vmatpush1.bf16.msra.mxu0 %v746
        %791 = vmatprep.subr.bf16.mxu0 %v750
        %792 = vmatpush1.bf16.msra.mxu0 %v749
        %793 = vmatprep.subr.bf16.mxu0 %v753
        %794 = vmatpush1.bf16.msra.mxu0 %v752
        %795 = vmatprep.subr.bf16.mxu0 0
        %796 = vmatpush1.bf16.msra.mxu0 0
        %797 = vmatprep.subr.bf16.mxu0 0
        %798 = vmatpush1.bf16.msra.mxu0 0
        %799 = vmatprep.subr.bf16.mxu0 0
        %800 = vmatpush1.bf16.msra.mxu0 0
        %801 = vmatprep.subr.bf16.mxu0 0
        %802 = vmatpush1.bf16.msra.mxu0 0
        %803 = vmatprep.subr.bf16.mxu0 0
        %804 = vmatpush1.bf16.msra.mxu0 0
        %805 = vmatprep.subr.bf16.mxu0 0
        %806 = vmatpush1.bf16.msra.mxu0 0
        %807 = vmatprep.subr.bf16.mxu0 0
        %808 = vmatpush1.bf16.msra.mxu0 0
        %809 = vmatprep.subr.bf16.mxu0 0
        %810 = vmatpush1.bf16.msra.mxu0 0
        %811 = vmatprep.mubr.bf16.mxu0 0
        %812 = vmatmul.mubr.bf16.gmra.mrb[0].mxu0 %v594
        %v813 = vpop.f32.mrb[0].mxu0
        %v814 = vadd.f32 %v639, %v813
        %v815 = vpop.f32.mrb[0].mxu0
        %v816 = vadd.f32 %v643, %v815
        %v817 = vpop.f32.mrb[0].mxu0
        %v818 = vadd.f32 %v639, %v817
        %v819 = vpop.f32.mrb[0].mxu0
        %v820 = vadd.f32 %v643, %v819
        %821 = vmatprep.mubr.bf16.mxu0 0
        %822 = vmatmul.mubr.bf16.gmra.mrb[0].mxu0 %v595
        %v823 = vpop.f32.mrb[0].mxu0
        %v824 = vadd.f32 %v639, %v823
        %v825 = vpop.f32.mrb[0].mxu0
        %v826 = vadd.f32 %v643, %v825
        %v827 = vpop.f32.mrb[0].mxu0
        %v828 = vadd.f32 %v639, %v827
        %v829 = vpop.f32.mrb[0].mxu0
        %v830 = vadd.f32 %v643, %v829
        %831 = vmatprep.mubr.bf16.mxu0 0
        %832 = vmatmul.mubr.bf16.gmra.mrb[0].mxu0 %v596
        %v833 = vpop.f32.mrb[0].mxu0
        %v834 = vadd.f32 %v639, %v833
        %v835 = vpop.f32.mrb[0].mxu0
        %v836 = vadd.f32 %v643, %v835
        %v837 = vpop.f32.mrb[0].mxu0
        %v838 = vadd.f32 %v639, %v837
        %v839 = vpop.f32.mrb[0].mxu0
        %v840 = vadd.f32 %v643, %v839
        %841 = vmatprep.mubr.bf16.mxu0 0
        %842 = vmatmul.mubr.bf16.gmra.mrb[0].mxu0 %v597
        %v843 = vpop.f32.mrb[0].mxu0
        %v844 = vadd.f32 %v639, %v843
        %v845 = vpop.f32.mrb[0].mxu0
        %v846 = vadd.f32 %v643, %v845
        %v847 = vpop.f32.mrb[0].mxu0
        %v848 = vadd.f32 %v639, %v847
        %v849 = vpop.f32.mrb[0].mxu0
        %v850 = vadd.f32 %v643, %v849
        %851 = vmatprep.mubr.bf16.mxu0 0
        %852 = vmatmul.mubr.bf16.gmra.mrb[0].mxu0 %v598
        %v853 = vpop.f32.mrb[0].mxu0
        %v854 = vadd.f32 %v639, %v853
        %v855 = vpop.f32.mrb[0].mxu0
        %v856 = vadd.f32 %v643, %v855
        %v857 = vpop.f32.mrb[0].mxu0
        %v858 = vadd.f32 %v639, %v857
        %v859 = vpop.f32.mrb[0].mxu0
        %v860 = vadd.f32 %v643, %v859
        %861 = vmatprep.mubr.bf16.mxu0 0
        %862 = vmatmul.mubr.bf16.gmra.mrb[0].mxu0 %v599
        %v863 = vpop.f32.mrb[0].mxu0
        %v864 = vadd.f32 %v639, %v863
        %v865 = vpop.f32.mrb[0].mxu0
        %v866 = vadd.f32 %v643, %v865
        %v867 = vpop.f32.mrb[0].mxu0
        %v868 = vadd.f32 %v639, %v867
        %v869 = vpop.f32.mrb[0].mxu0
        %v870 = vadd.f32 %v643, %v869
        %871 = vmatprep.mubr.bf16.mxu0 0
        %872 = vmatmul.mubr.bf16.gmra.mrb[0].mxu0 %v600
        %v873 = vpop.f32.mrb[0].mxu0
        %v874 = vadd.f32 %v639, %v873
        %v875 = vpop.f32.mrb[0].mxu0
        %v876 = vadd.f32 %v643, %v875
        %v877 = vpop.f32.mrb[0].mxu0
        %v878 = vadd.f32 %v639, %v877
        %v879 = vpop.f32.mrb[0].mxu0
        %v880 = vadd.f32 %v643, %v879
        %881 = vmatprep.mubr.bf16.mxu0 0
        %882 = vmatmul.mubr.bf16.gmra.mrb[0].mxu0 %v601
        %v883 = vpop.f32.mrb[0].mxu0
        %v884 = vadd.f32 %v639, %v883
        %v885 = vpop.f32.mrb[0].mxu0
        %v886 = vadd.f32 %v643, %v885
        %v887 = vpop.f32.mrb[0].mxu0
        %v888 = vadd.f32 %v639, %v887
        %v889 = vpop.f32.mrb[0].mxu0
        %v890 = vadd.f32 %v643, %v889
        %891 = vdwg.mxu0
        %892 = vmatprep.subr.bf16.mxu0 0
        %893 = vmatpush1.bf16.msra.mxu0 %v733
        %894 = vmatprep.subr.bf16.mxu0 0
        %895 = vmatpush1.bf16.msra.mxu0 %v736
        %896 = vmatprep.subr.bf16.mxu0 0
        %897 = vmatpush1.bf16.msra.mxu0 %v739
        %898 = vmatprep.subr.bf16.mxu0 0
        %899 = vmatpush1.bf16.msra.mxu0 %v742
        %900 = vmatprep.subr.bf16.mxu0 0
        %901 = vmatpush1.bf16.msra.mxu0 %v745
        %902 = vmatprep.subr.bf16.mxu0 0
        %903 = vmatpush1.bf16.msra.mxu0 %v748
        %904 = vmatprep.subr.bf16.mxu0 0
        %905 = vmatpush1.bf16.msra.mxu0 %v751
        %906 = vmatprep.subr.bf16.mxu0 0
        %907 = vmatpush1.bf16.msra.mxu0 %v754
        %908 = vmatprep.subr.bf16.mxu0 0
        %909 = vmatpush1.bf16.msra.mxu0 0
        %910 = vmatprep.subr.bf16.mxu0 0
        %911 = vmatpush1.bf16.msra.mxu0 0
        %912 = vmatprep.subr.bf16.mxu0 0
        %913 = vmatpush1.bf16.msra.mxu0 0
        %914 = vmatprep.subr.bf16.mxu0 0
        %915 = vmatpush1.bf16.msra.mxu0 0
        %916 = vmatprep.subr.bf16.mxu0 0
        %917 = vmatpush1.bf16.msra.mxu0 0
        %918 = vmatprep.subr.bf16.mxu0 0
        %919 = vmatpush1.bf16.msra.mxu0 0
        %920 = vmatprep.subr.bf16.mxu0 0
        %921 = vmatpush1.bf16.msra.mxu0 0
        %922 = vmatprep.subr.bf16.mxu0 0
        %923 = vmatpush1.bf16.msra.mxu0 0
        %924 = vmatprep.mubr.bf16.mxu0 0
        %925 = vmatmul.mubr.bf16.gmra.mrb[0].mxu0 %v594
        %v926 = vpop.f32.mrb[0].mxu0
        %v927 = vadd.f32 %v647, %v926
        %v928 = vpop.f32.mrb[0].mxu0
        %v929 = vpop.f32.mrb[0].mxu0
        %v930 = vadd.f32 %v647, %v929
        %v931 = vpop.f32.mrb[0].mxu0
        %932 = vmatprep.mubr.bf16.mxu0 0
        %933 = vmatmul.mubr.bf16.gmra.mrb[0].mxu0 %v595
        %v934 = vpop.f32.mrb[0].mxu0
        %v935 = vadd.f32 %v647, %v934
        %v936 = vpop.f32.mrb[0].mxu0
        %v937 = vpop.f32.mrb[0].mxu0
        %v938 = vadd.f32 %v647, %v937
        %v939 = vpop.f32.mrb[0].mxu0
        %940 = vmatprep.mubr.bf16.mxu0 0
        %941 = vmatmul.mubr.bf16.gmra.mrb[0].mxu0 %v596
        %v942 = vpop.f32.mrb[0].mxu0
        %v943 = vadd.f32 %v647, %v942
        %v944 = vpop.f32.mrb[0].mxu0
        %v945 = vpop.f32.mrb[0].mxu0
        %v946 = vadd.f32 %v647, %v945
        %v947 = vpop.f32.mrb[0].mxu0
        %948 = vmatprep.mubr.bf16.mxu0 0
        %949 = vmatmul.mubr.bf16.gmra.mrb[0].mxu0 %v597
        %v950 = vpop.f32.mrb[0].mxu0
        %v951 = vadd.f32 %v647, %v950
        %v952 = vpop.f32.mrb[0].mxu0
        %v953 = vpop.f32.mrb[0].mxu0
        %v954 = vadd.f32 %v647, %v953
        %v955 = vpop.f32.mrb[0].mxu0
        %956 = vmatprep.mubr.bf16.mxu0 0
        %957 = vmatmul.mubr.bf16.gmra.mrb[0].mxu0 %v598
        %v958 = vpop.f32.mrb[0].mxu0
        %v959 = vadd.f32 %v647, %v958
        %v960 = vpop.f32.mrb[0].mxu0
        %v961 = vpop.f32.mrb[0].mxu0
        %v962 = vadd.f32 %v647, %v961
        %v963 = vpop.f32.mrb[0].mxu0
        %964 = vmatprep.mubr.bf16.mxu0 0
        %965 = vmatmul.mubr.bf16.gmra.mrb[0].mxu0 %v599
        %v966 = vpop.f32.mrb[0].mxu0
        %v967 = vadd.f32 %v647, %v966
        %v968 = vpop.f32.mrb[0].mxu0
        %v969 = vpop.f32.mrb[0].mxu0
        %v970 = vadd.f32 %v647, %v969
        %v971 = vpop.f32.mrb[0].mxu0
        %972 = vmatprep.mubr.bf16.mxu0 0
        %973 = vmatmul.mubr.bf16.gmra.mrb[0].mxu0 %v600
        %v974 = vpop.f32.mrb[0].mxu0
        %v975 = vadd.f32 %v647, %v974
        %v976 = vpop.f32.mrb[0].mxu0
        %v977 = vpop.f32.mrb[0].mxu0
        %v978 = vadd.f32 %v647, %v977
        %v979 = vpop.f32.mrb[0].mxu0
        %980 = vmatprep.mubr.bf16.mxu0 0
        %981 = vmatmul.mubr.bf16.gmra.mrb[0].mxu0 %v601
        %v982 = vpop.f32.mrb[0].mxu0
        %v983 = vadd.f32 %v647, %v982
        %v984 = vpop.f32.mrb[0].mxu0
        %v985 = vpop.f32.mrb[0].mxu0
        %v986 = vadd.f32 %v647, %v985
        %v987 = vpop.f32.mrb[0].mxu0
        %988 = vdwg.mxu0
        %v989 = vpack.c.bf16 %v818, %v814
        %v990 = vpack.c.bf16 %v828, %v824
        %v991 = vpack.c.bf16 %v838, %v834
        %v992 = vpack.c.bf16 %v848, %v844
        %v993 = vpack.c.bf16 %v858, %v854
        %v994 = vpack.c.bf16 %v868, %v864
        %v995 = vpack.c.bf16 %v878, %v874
        %v996 = vpack.c.bf16 %v888, %v884
        %v1005 = vunpack.c.l.b16 %v989
        %v1006 = vunpack.c.h.b16 %v989
        %v1007 = vunpack.c.l.b16 %v990
        %v1008 = vunpack.c.h.b16 %v990
        %v1009 = vunpack.c.l.b16 %v991
        %v1010 = vunpack.c.h.b16 %v991
        %v1011 = vunpack.c.l.b16 %v992
        %v1012 = vunpack.c.h.b16 %v992
        %v1013 = vunpack.c.l.b16 %v993
        %v1014 = vunpack.c.h.b16 %v993
        %v1015 = vunpack.c.l.b16 %v994
        %v1016 = vunpack.c.h.b16 %v994
        %v1017 = vunpack.c.l.b16 %v995
        %v1018 = vunpack.c.h.b16 %v995
        %v1019 = vunpack.c.l.b16 %v996
        %v1020 = vunpack.c.h.b16 %v996
        %v1021 = vpack.c.b16 %v1005, %v1005
        %v1022 = vpack.c.b16 %v1006, %v1006
        %v1023 = vpack.c.b16 %v1007, %v1007
        %v1024 = vpack.c.b16 %v1008, %v1008
        %v1025 = vpack.c.b16 %v1009, %v1009
        %v1026 = vpack.c.b16 %v1010, %v1010
        %v1027 = vpack.c.b16 %v1011, %v1011
        %v1028 = vpack.c.b16 %v1012, %v1012
        %v1029 = vpack.c.b16 %v1013, %v1013
        %v1030 = vpack.c.b16 %v1014, %v1014
        %v1031 = vpack.c.b16 %v1015, %v1015
        %v1032 = vpack.c.b16 %v1016, %v1016
        %v1033 = vpack.c.b16 %v1017, %v1017
        %v1034 = vpack.c.b16 %v1018, %v1018
        %v1035 = vpack.c.b16 %v1019, %v1019
        %v1036 = vpack.c.b16 %v1020, %v1020
        %1053 = vst [vmem:[%s337] sm:$0xf] %v1021
        %1054 = vst [vmem:[%s337 + $0x4] sm:$0xf] %v1022
        %1055 = vst [vmem:[%s337 + $0x8] sm:$0xf] %v1023
        %1056 = vst [vmem:[%s337 + $0xc] sm:$0xf] %v1024
        %1057 = vst [vmem:[%s337 + $0x10] sm:$0xf] %v1025
        %1058 = vst [vmem:[%s337 + $0x14] sm:$0xf] %v1026
        %1059 = vst [vmem:[%s337 + $0x18] sm:$0xf] %v1027
        %1060 = vst [vmem:[%s337 + $0x1c] sm:$0xf] %v1028
        %1061 = vst [vmem:[%s337 + $0x20] sm:$0xf] %v1029
        %1062 = vst [vmem:[%s337 + $0x24] sm:$0xf] %v1030
        %1063 = vst [vmem:[%s337 + $0x28] sm:$0xf] %v1031
        %1064 = vst [vmem:[%s337 + $0x2c] sm:$0xf] %v1032
        %1065 = vst [vmem:[%s337 + $0x30] sm:$0xf] %v1033
        %1066 = vst [vmem:[%s337 + $0x34] sm:$0xf] %v1034
        %1067 = vst [vmem:[%s337 + $0x38] sm:$0xf] %v1035
        %1068 = vst [vmem:[%s337 + $0x3c] sm:$0xf] %v1036
        %1069 = vxpose.xlu0.b32.start [1/16] %v816, 128
        %1070 = vxpose.xlu0.b32.cont [2/16] %v820, 128
        %1071 = vxpose.xlu0.b32.cont [3/16] %v826, 128
        %1072 = vxpose.xlu0.b32.cont [4/16] %v830, 128
        %1073 = vxpose.xlu0.b32.cont [5/16] %v836, 128
        %1074 = vxpose.xlu0.b32.cont [6/16] %v840, 128
        %1075 = vxpose.xlu0.b32.cont [7/16] %v846, 128
        %1076 = vxpose.xlu0.b32.cont [8/16] %v850, 128
        %1077 = vxpose.xlu0.b32.cont [9/16] %v856, 128
        %1078 = vxpose.xlu0.b32.cont [10/16] %v860, 128
        %1079 = vxpose.xlu0.b32.cont [11/16] %v866, 128
        %1080 = vxpose.xlu0.b32.cont [12/16] %v870, 128
        %1081 = vxpose.xlu0.b32.cont [13/16] %v876, 128
        %1082 = vxpose.xlu0.b32.cont [14/16] %v880, 128
        %1083 = vxpose.xlu0.b32.cont [15/16] %v886, 128
        %1084 = vxpose.xlu0.b32.end [16/16] %v890, 128
        %v1085 = vpop.trf.xlu0
        %v1086 = vpop.trf.xlu0
        %v1087 = vpop.trf.xlu0
        %v1088 = vpop.trf.xlu0
        %v1089 = vpop.trf.xlu0
        %v1090 = vpop.trf.xlu0
        %v1091 = vpop.trf.xlu0
        %v1092 = vpop.trf.xlu0
        %v1093 = vpop.trf.xlu0
        %v1094 = vpop.trf.xlu0
        %v1095 = vpop.trf.xlu0
        %v1096 = vpop.trf.xlu0
        %v1097 = vpop.trf.xlu0
        %v1098 = vpop.trf.xlu0
        %v1099 = vpop.trf.xlu0
        %v1100 = vpop.trf.xlu0
        %v1101 = vpack.c.bf16 %v1086, %v1085
        %v1102 = vpack.c.bf16 %v1088, %v1087
        %v1103 = vpack.c.bf16 %v1090, %v1089
        %v1104 = vpack.c.bf16 %v1092, %v1091
        %v1105 = vpack.c.bf16 %v1094, %v1093
        %v1106 = vpack.c.bf16 %v1096, %v1095
        %v1107 = vpack.c.bf16 %v1098, %v1097
        %v1108 = vpack.c.bf16 %v1100, %v1099
        %v1117 = vunpack.c.l.b16 %v1101
        %v1118 = vunpack.c.h.b16 %v1101
        %v1119 = vunpack.c.l.b16 %v1102
        %v1120 = vunpack.c.h.b16 %v1102
        %v1121 = vunpack.c.l.b16 %v1103
        %v1122 = vunpack.c.h.b16 %v1103
        %v1123 = vunpack.c.l.b16 %v1104
        %v1124 = vunpack.c.h.b16 %v1104
        %v1125 = vunpack.c.l.b16 %v1105
        %v1126 = vunpack.c.h.b16 %v1105
        %v1127 = vunpack.c.l.b16 %v1106
        %v1128 = vunpack.c.h.b16 %v1106
        %v1129 = vunpack.c.l.b16 %v1107
        %v1130 = vunpack.c.h.b16 %v1107
        %v1131 = vunpack.c.l.b16 %v1108
        %v1132 = vunpack.c.h.b16 %v1108
        %v1133 = vpack.c.b16 %v1117, %v1117
        %v1134 = vpack.c.b16 %v1118, %v1118
        %v1135 = vpack.c.b16 %v1119, %v1119
        %v1136 = vpack.c.b16 %v1120, %v1120
        %v1137 = vpack.c.b16 %v1121, %v1121
        %v1138 = vpack.c.b16 %v1122, %v1122
        %v1139 = vpack.c.b16 %v1123, %v1123
        %v1140 = vpack.c.b16 %v1124, %v1124
        %v1141 = vpack.c.b16 %v1125, %v1125
        %v1142 = vpack.c.b16 %v1126, %v1126
        %v1143 = vpack.c.b16 %v1127, %v1127
        %v1144 = vpack.c.b16 %v1128, %v1128
        %v1145 = vpack.c.b16 %v1129, %v1129
        %v1146 = vpack.c.b16 %v1130, %v1130
        %v1147 = vpack.c.b16 %v1131, %v1131
        %v1148 = vpack.c.b16 %v1132, %v1132
        %1165 = vst [vmem:[%s344] sm:$0xf] %v1133
        %1166 = vst [vmem:[%s344 + $0x4] sm:$0xf] %v1134
        %1167 = vst [vmem:[%s344 + $0x8] sm:$0xf] %v1135
        %1168 = vst [vmem:[%s344 + $0xc] sm:$0xf] %v1136
        %1169 = vst [vmem:[%s344 + $0x10] sm:$0xf] %v1137
        %1170 = vst [vmem:[%s344 + $0x14] sm:$0xf] %v1138
        %1171 = vst [vmem:[%s344 + $0x18] sm:$0xf] %v1139
        %1172 = vst [vmem:[%s344 + $0x1c] sm:$0xf] %v1140
        %1173 = vst [vmem:[%s344 + $0x20] sm:$0xf] %v1141
        %1174 = vst [vmem:[%s344 + $0x24] sm:$0xf] %v1142
        %1175 = vst [vmem:[%s344 + $0x28] sm:$0xf] %v1143
        %1176 = vst [vmem:[%s344 + $0x2c] sm:$0xf] %v1144
        %1177 = vst [vmem:[%s344 + $0x30] sm:$0xf] %v1145
        %1178 = vst [vmem:[%s344 + $0x34] sm:$0xf] %v1146
        %1179 = vst [vmem:[%s344 + $0x38] sm:$0xf] %v1147
        %1180 = vst [vmem:[%s344 + $0x3c] sm:$0xf] %v1148
        %1181 = vxpose.xlu0.b32.start [1/16] %v927, 128
        %1182 = vxpose.xlu0.b32.cont [2/16] %v930, 128
        %1183 = vxpose.xlu0.b32.cont [3/16] %v935, 128
        %1184 = vxpose.xlu0.b32.cont [4/16] %v938, 128
        %1185 = vxpose.xlu0.b32.cont [5/16] %v943, 128
        %1186 = vxpose.xlu0.b32.cont [6/16] %v946, 128
        %1187 = vxpose.xlu0.b32.cont [7/16] %v951, 128
        %1188 = vxpose.xlu0.b32.cont [8/16] %v954, 128
        %1189 = vxpose.xlu0.b32.cont [9/16] %v959, 128
        %1190 = vxpose.xlu0.b32.cont [10/16] %v962, 128
        %1191 = vxpose.xlu0.b32.cont [11/16] %v967, 128
        %1192 = vxpose.xlu0.b32.cont [12/16] %v970, 128
        %1193 = vxpose.xlu0.b32.cont [13/16] %v975, 128
        %1194 = vxpose.xlu0.b32.cont [14/16] %v978, 128
        %1195 = vxpose.xlu0.b32.cont [15/16] %v983, 128
        %1196 = vxpose.xlu0.b32.end [16/16] %v986, 128
        %v1197 = vpop.trf.xlu0
        %v1198 = vpop.trf.xlu0
        %v1199 = vpop.trf.xlu0
        %v1200 = vpop.trf.xlu0
        %v1201 = vpop.trf.xlu0
        %v1202 = vpop.trf.xlu0
        %v1203 = vpop.trf.xlu0
        %v1204 = vpop.trf.xlu0
        %v1205 = vpop.trf.xlu0
        %v1206 = vpop.trf.xlu0
        %v1207 = vpop.trf.xlu0
        %v1208 = vpop.trf.xlu0
        %v1209 = vpop.trf.xlu0
        %v1210 = vpop.trf.xlu0
        %v1211 = vpop.trf.xlu0
        %v1212 = vpop.trf.xlu0
        %v1213 = vpack.c.bf16 %v1198, %v1197
        %v1214 = vpack.c.bf16 %v1200, %v1199
        %v1215 = vpack.c.bf16 %v1202, %v1201
        %v1216 = vpack.c.bf16 %v1204, %v1203
        %v1217 = vpack.c.bf16 %v1206, %v1205
        %v1218 = vpack.c.bf16 %v1208, %v1207
        %v1219 = vpack.c.bf16 %v1210, %v1209
        %v1220 = vpack.c.bf16 %v1212, %v1211
        %v1229 = vunpack.c.l.b16 %v1213
        %v1230 = vunpack.c.h.b16 %v1213
        %v1231 = vunpack.c.l.b16 %v1214
        %v1232 = vunpack.c.h.b16 %v1214
        %v1233 = vunpack.c.l.b16 %v1215
        %v1234 = vunpack.c.h.b16 %v1215
        %v1235 = vunpack.c.l.b16 %v1216
        %v1236 = vunpack.c.h.b16 %v1216
        %v1237 = vunpack.c.l.b16 %v1217
        %v1238 = vunpack.c.h.b16 %v1217
        %v1239 = vunpack.c.l.b16 %v1218
        %v1240 = vunpack.c.h.b16 %v1218
        %v1241 = vunpack.c.l.b16 %v1219
        %v1242 = vunpack.c.h.b16 %v1219
        %v1243 = vunpack.c.l.b16 %v1220
        %v1244 = vunpack.c.h.b16 %v1220
        %v1245 = vpack.c.b16 %v1229, %v1229
        %v1246 = vpack.c.b16 %v1230, %v1230
        %v1247 = vpack.c.b16 %v1231, %v1231
        %v1248 = vpack.c.b16 %v1232, %v1232
        %v1249 = vpack.c.b16 %v1233, %v1233
        %v1250 = vpack.c.b16 %v1234, %v1234
        %v1251 = vpack.c.b16 %v1235, %v1235
        %v1252 = vpack.c.b16 %v1236, %v1236
        %v1253 = vpack.c.b16 %v1237, %v1237
        %v1254 = vpack.c.b16 %v1238, %v1238
        %v1255 = vpack.c.b16 %v1239, %v1239
        %v1256 = vpack.c.b16 %v1240, %v1240
        %v1257 = vpack.c.b16 %v1241, %v1241
        %v1258 = vpack.c.b16 %v1242, %v1242
        %v1259 = vpack.c.b16 %v1243, %v1243
        %v1260 = vpack.c.b16 %v1244, %v1244
        %1277 = vst [vmem:[%s351] sm:$0xf] %v1245
        %1278 = vst [vmem:[%s351 + $0x4] sm:$0xf] %v1246
        %1279 = vst [vmem:[%s351 + $0x8] sm:$0xf] %v1247
        %1280 = vst [vmem:[%s351 + $0xc] sm:$0xf] %v1248
        %1281 = vst [vmem:[%s351 + $0x10] sm:$0xf] %v1249
        %1282 = vst [vmem:[%s351 + $0x14] sm:$0xf] %v1250
        %1283 = vst [vmem:[%s351 + $0x18] sm:$0xf] %v1251
        %1284 = vst [vmem:[%s351 + $0x1c] sm:$0xf] %v1252
        %1285 = vst [vmem:[%s351 + $0x20] sm:$0xf] %v1253
        %1286 = vst [vmem:[%s351 + $0x24] sm:$0xf] %v1254
        %1287 = vst [vmem:[%s351 + $0x28] sm:$0xf] %v1255
        %1288 = vst [vmem:[%s351 + $0x2c] sm:$0xf] %v1256
        %1289 = vst [vmem:[%s351 + $0x30] sm:$0xf] %v1257
        %1290 = vst [vmem:[%s351 + $0x34] sm:$0xf] %v1258
        %1291 = vst [vmem:[%s351 + $0x38] sm:$0xf] %v1259
        %1292 = vst [vmem:[%s351 + $0x3c] sm:$0xf] %v1260
        %s1293 = sand.u32 %s163, 1
        %s1294 = scalar_lea.sflag [#allocation4], %s1293
        %s1295 = sand.u32 %s163, 1
        %s1296 = smul.addr %s1295, 64
        %s1297 = scalar_lea.vmem [#allocation7], %s1296
        %s1298 = sand.u32 %s29, 1
        %s1299 = scalar_lea.sflag [#allocation9], %s1298
        %s1300 = sand.u32 %s191, 1
        %s1301 = smul.addr %s1300, 64
        %s1302 = scalar_lea.vmem [#allocation8], %s1301
        %s1303 = sand.u32 %s29, 1
        %s1304 = scalar_lea.sflag [#allocation9], %s1303
        %s1305 = sand.u32 %s219, 1
        %s1306 = smul.addr %s1305, 64
        %s1307 = scalar_lea.vmem [#allocation10], %s1306
        // Predicated region
        $region49: #{tpu_custom_call.1} parent=39 // pred_check
          %p1308 = pneg %p173
        $region50: #{tpu_custom_call.1} parent=39 // pred_check_branch
          %1310 = sbr.rel (%p1308) target = $region52
        $region51: #{tpu_custom_call.1} parent=39 // pred_region
          %s1311 = smul.u32 16, %s34
          %s1313 = ssub.s32 1024, 1024
          %1314 = vsyncadd %s1294, %s1313
          %s1315 = smul.addr %s33, 32
          %s1316 = sadd.s32 %s1311, %s1315
          %s1317 = smul.addr %s1316, 64
          %s1318 = scalar_lea.hbm %s5, %s1317
          %s1319 = sshll.u32 %s1297, 4
          %s1320 = int_to_ptr.vmem [resolvable:$true] %s1319
          %1325 = dma.vmem_to_hbm [thread:$0]  %s1320, 1024, %s1318, %s1294, 64, 64, 4
        $region52: #{tpu_custom_call.1} parent=39 // pred_fallthru
          _
        // Predicated region
        $region53: #{tpu_custom_call.1} parent=39 // pred_check
          %p1326 = pneg %p201
        $region54: #{tpu_custom_call.1} parent=39 // pred_check_branch
          %1328 = sbr.rel (%p1326) target = $region56
        $region55: #{tpu_custom_call.1} parent=39 // pred_region
          %s1330 = ssub.s32 1024, 1024
          %1331 = vsyncadd %s1299, %s1330
          %s1332 = smul.addr %s33, 32
          %s1333 = sadd.s32 %s34, %s1332
          %s1334 = smul.addr %s1333, 64
          %s1335 = scalar_lea.hbm %s6, %s1334
          %s1336 = sshll.u32 %s1302, 4
          %s1337 = int_to_ptr.vmem [resolvable:$true] %s1336
          %1342 = dma.vmem_to_hbm [thread:$0]  %s1337, 1024, %s1335, %s1299, 64, 128, 4
        $region56: #{tpu_custom_call.1} parent=39 // pred_fallthru
          _
        // Predicated region
        $region57: #{tpu_custom_call.1} parent=39 // pred_check
          %p1343 = pneg %p229
        $region58: #{tpu_custom_call.1} parent=39 // pred_check_branch
          %1345 = sbr.rel (%p1343) target = $region60
        $region59: #{tpu_custom_call.1} parent=39 // pred_region
          %s1347 = ssub.s32 1024, 1024
          %1348 = vsyncadd %s1304, %s1347
          %s1349 = smul.addr %s33, 32
          %s1350 = sadd.s32 %s34, %s1349
          %s1351 = smul.addr %s1350, 64
          %s1352 = scalar_lea.hbm %s7, %s1351
          %s1353 = sshll.u32 %s1307, 4
          %s1354 = int_to_ptr.vmem [resolvable:$true] %s1353
          %1359 = dma.vmem_to_hbm [thread:$0]  %s1354, 1024, %s1352, %s1304, 64, 128, 4
        $region60: #{tpu_custom_call.1} parent=39 // pred_fallthru
          _
      $region40: #{tpu_custom_call.1} parent=5 // pred_fallthru
        _
      %p1360 = scmp.le.s32.totalorder 2, %s24
      // Predicated region
      $region61: #{tpu_custom_call.1} parent=5 // pred_check
        %p1361 = pneg %p1360
      $region62: #{tpu_custom_call.1} parent=5 // pred_check_branch
        %1363 = sbr.rel (%p1361) target = $region64
      $region63: #{tpu_custom_call.1} parent=5 // pred_region
        %s1364 = ssub.s32 %s24, 2
        // Predicated region
        $region65: #{tpu_custom_call.1} parent=63 // pred_check
          %p1365 = pneg %p179
        $region66: #{tpu_custom_call.1} parent=63 // pred_check_branch
          %1367 = sbr.rel (%p1365) target = $region68
        $region67: #{tpu_custom_call.1} parent=63 // pred_region
          %s1368 = sand.u32 %s164, 1
          %s1369 = scalar_lea.sflag [#allocation4], %s1368
          %s1370 = sand.u32 %s164, 1
          %s1371 = smul.addr %s1370, 64
          %s1372 = scalar_lea.vmem [#allocation7], %s1371
          %1373 = dma.done %s1369, 1024
        $region68: #{tpu_custom_call.1} parent=63 // pred_fallthru
          _
        // Predicated region
        $region69: #{tpu_custom_call.1} parent=63 // pred_check
          %p1374 = pneg %p207
        $region70: #{tpu_custom_call.1} parent=63 // pred_check_branch
          %1376 = sbr.rel (%p1374) target = $region72
        $region71: #{tpu_custom_call.1} parent=63 // pred_region
          %s1377 = sand.u32 %s30, 1
          %s1378 = scalar_lea.sflag [#allocation9], %s1377
          %s1379 = sand.u32 %s192, 1
          %s1380 = smul.addr %s1379, 64
          %s1381 = scalar_lea.vmem [#allocation8], %s1380
          %1382 = dma.done %s1378, 1024
        $region72: #{tpu_custom_call.1} parent=63 // pred_fallthru
          _
        // Predicated region
        $region73: #{tpu_custom_call.1} parent=63 // pred_check
          %p1383 = pneg %p235
        $region74: #{tpu_custom_call.1} parent=63 // pred_check_branch
          %1385 = sbr.rel (%p1383) target = $region76
        $region75: #{tpu_custom_call.1} parent=63 // pred_region
          %s1386 = sand.u32 %s30, 1
          %s1387 = scalar_lea.sflag [#allocation9], %s1386
          %s1388 = sand.u32 %s220, 1
          %s1389 = smul.addr %s1388, 64
          %s1390 = scalar_lea.vmem [#allocation10], %s1389
          %1391 = dma.done %s1387, 1024
        $region76: #{tpu_custom_call.1} parent=63 // pred_fallthru
          _
      $region64: #{tpu_custom_call.1} parent=5 // pred_fallthru
        _
    $region6: #{tpu_custom_call.1} parent=1 // loop_footer
      %s28 = sadd.s32 1, %s24
    $region7: #{tpu_custom_call.1} parent=1 // loop_footer_branch
      %23 = sbr.rel target = $region3
    $region8: #{tpu_custom_call.1} parent=1 // loop_exit
      _
    %1392 = vsyncpa [#allocation3], 1
    %s1393 = scalar_lea.sflag [#allocation3], 1
    %1394 = vsyncpa %s1393, 1
    %1395 = vsyncpa [#allocation6], 1
    %1396 = vsyncpa [#allocation4], 1
    %s1397 = scalar_lea.sflag [#allocation4], 1
    %1398 = vsyncpa %s1397, 1
    %1399 = vsyncpa [#allocation9], 1
    %s1400 = scalar_lea.sflag [#allocation9], 1
    %1401 = vsyncpa %s1400, 1

</llo_original>
